<compile_context>
chip_gen: v6e
topology: v6e:2x2x1
jax: 0.10.0
libtpu: 0.0.40
codegen_flags: <defaults>
</compile_context>

<pallas_src>
import functools

import numpy as np
import jax
import jax.numpy as jnp
from jax.experimental import pallas as pl
from jax.experimental.pallas import tpu as pltpu


KERNEL_SIZE = 15
THRESHOLD = 0.6
ITERATIONS = 1


def make_soft_erosion_weight(kernel_size: int = KERNEL_SIZE) -> jnp.ndarray:
    """Deterministic buffer from SoftErosion.__init__ (shape (K, K), f32)."""
    r = kernel_size // 2
    y_idx, x_idx = np.meshgrid(
        np.arange(kernel_size, dtype=np.float64),
        np.arange(kernel_size, dtype=np.float64),
        indexing="ij",
    )
    dist = np.sqrt((x_idx - r) ** 2 + (y_idx - r) ** 2)
    kernel = dist.max() - dist
    kernel = kernel / kernel.sum()
    return jnp.asarray(kernel, dtype=jnp.float32)


def _round_up(x: int, m: int) -> int:
    return (x + m - 1) // m * m


def _largest_divisor_le(n: int, cap: int) -> int:
    cap = int(max(1, min(n, cap)))
    for p in range(cap, 0, -1):
        if n % p == 0:
            return p
    return 1


def _vmem_capacity_bytes() -> int:
    try:
        return int(pltpu.get_tpu_info().vmem_capacity_bytes)
    except Exception:
        return 64 << 20        # conservative fallback = v7x per-core VMEM


def make_block_bands(weight: jnp.ndarray, tile: int) -> jnp.ndarray:
    """Shift-invariant column band blocks, shape (K, 3, T, T), bf16.

    bands[ky, di, c, j] = weight[ky, (di-1)*T + c - j + R] when that horizontal
    tap exists, else 0, so that for output column tile t:
        conv[:, tT:(t+1)T] = sum_{ky, d in {-1,0,1}}
                             x_pad[ky:ky+He, (t+d)T:(t+d+1)T] @ bands[ky, d+1]
    with the W-axis zero padding handled by skipping out-of-range tiles and by
    the zeroed entries of the edge blocks.
    """
    K = weight.shape[0]
    R = K // 2
    c = jnp.arange(tile)[:, None]
    j = jnp.arange(tile)[None, :]
    blocks = []
    for d in (-1, 0, 1):
        tap = d * tile + c - j + R                        # (T, T)
        valid = (tap >= 0) & (tap < K)
        tap_c = jnp.clip(tap, 0, K - 1)
        blocks.append(jnp.where(valid[None, :, :], weight[:, tap_c], 0.0))
    return jnp.stack(blocks, axis=1).astype(jnp.bfloat16)  # (K, 3, T, T)


def _conv_max_kernel(xp_ref, band_ref, conv_ref, bmax_ref, *,
                     H, W, K, P, T, threshold):
    """15x15 conv of P planes via bf16 MXU matmuls + sub-threshold running max.

    xp_ref:   (P, Hp, We) f32   zero-padded planes (halo R along H)
    band_ref: (K, 3, T, T) bf16 shift-invariant column band blocks
    conv_ref: (P, He, We) f32   conv output (padded region holds junk)
    bmax_ref: (1, He, T)  f32   per-block running max of conv values < threshold
    """
    He = conv_ref.shape[1]
    We = conv_ref.shape[2]
    n_t = We // T
    M = P * He

    # Validity of the (unpadded) region; pure VPU work, hoisted out of the loops.
    row_ok = jax.lax.broadcasted_iota(jnp.int32, (He, T), 0) < H
    col_iota = jax.lax.broadcasted_iota(jnp.int32, (He, T), 1)

    run_max = jnp.full((He, T), -jnp.inf, dtype=jnp.float32)
    for t in range(n_t):                      # output column tile (static)
        acc = jnp.zeros((M, T), jnp.float32)
        for d in (-1, 0, 1):                  # input column tile offset
            ts = t + d
            if ts < 0 or ts >= n_t:
                continue                      # implicit zero padding along W
            for ky in range(K):               # vertical taps, static unroll
                # All P planes batched into one (P*He, T) LHS: the band block
                # is pushed to the MXU once per (t, d, ky) and M fills the MXU.
                lhs = (xp_ref[:, ky:ky + He, ts * T:(ts + 1) * T]
                       .reshape(M, T)
                       .astype(jnp.bfloat16))
                acc = acc + jnp.dot(lhs, band_ref[ky, d + 1],
                                    preferred_element_type=jnp.float32)
        acc3 = acc.reshape(P, He, T)
        conv_ref[:, :, t * T:(t + 1) * T] = acc3

        # Running max of sub-threshold values over the valid region only,
        # kept as an elementwise (He, T) vector -> free filler under the MXU.
        valid = row_ok & (col_iota < (W - t * T))
        cand = jnp.where(valid & (acc3 < threshold), acc3, -jnp.inf)
        run_max = jnp.maximum(run_max, cand.max(axis=0))
    bmax_ref[0] = run_max


def _finalize_kernel(inv_ref, conv_ref, out_ref, mask_ref, *, threshold):
    """Elementwise threshold / normalize / mask pass (lane-dense blocks)."""
    c = conv_ref[...]
    m = c >= threshold
    out_ref[...] = jnp.where(m, jnp.float32(1.0), c * inv_ref[0])
    mask_ref[...] = m.astype(jnp.int8)        # 1-byte mask output


def _conv_pass(planes, band, *, H, W, He, We, Hp, K, T, P, threshold, vmem_limit):
    NC = planes.shape[0]
    R = K // 2
    G = NC // P
    # Pad H with the halo (+ tail to the sublane-aligned extent) and W up to the
    # lane-aligned extent; the W halo handling lives inside the band blocks.
    xp = jnp.pad(planes, ((0, 0), (R, Hp - H - R), (0, We - W)))

    kern = functools.partial(_conv_max_kernel, H=H, W=W, K=K, P=P, T=T,
                             threshold=threshold)
    conv, bmax = pl.pallas_call(
        kern,
        out_shape=(jax.ShapeDtypeStruct((NC, He, We), jnp.float32),
                   jax.ShapeDtypeStruct((G, He, T), jnp.float32)),
        grid_spec=pltpu.PrefetchScalarGridSpec(
            num_scalar_prefetch=0,
            grid=(G,),
            in_specs=[
                pl.BlockSpec((P, Hp, We), lambda i: (i, 0, 0)),
                # Constant index_map: the band stays resident.  (Accepting the
                # default double buffer here; it is a few MiB at most.)
                pl.BlockSpec((K, 3, T, T), lambda i: (0, 0, 0, 0)),
            ],
            out_specs=[
                pl.BlockSpec((P, He, We), lambda i: (i, 0, 0)),
                pl.BlockSpec((1, He, T), lambda i: (i, 0, 0)),
            ],
        ),
        compiler_params=pltpu.CompilerParams(
            dimension_semantics=("parallel",),
            vmem_limit_bytes=vmem_limit,
        ),
    )(xp, band)
    return conv, bmax


def _finalize_pass(conv2d, inv, *, threshold, RB, vmem_limit):
    rows, We = conv2d.shape
    kern = functools.partial(_finalize_kernel, threshold=threshold)
    out, mask = pl.pallas_call(
        kern,
        out_shape=(jax.ShapeDtypeStruct((rows, We), jnp.float32),
                   jax.ShapeDtypeStruct((rows, We), jnp.int8)),
        grid_spec=pltpu.PrefetchScalarGridSpec(
            num_scalar_prefetch=0,
            grid=(rows // RB,),
            in_specs=[
                pl.BlockSpec(memory_space=pltpu.MemorySpace.SMEM),  # 1/denominator
                pl.BlockSpec((RB, We), lambda i: (i, 0)),
            ],
            out_specs=[
                pl.BlockSpec((RB, We), lambda i: (i, 0)),
                pl.BlockSpec((RB, We), lambda i: (i, 0)),
            ],
        ),
        compiler_params=pltpu.CompilerParams(
            dimension_semantics=("parallel",),
            vmem_limit_bytes=vmem_limit,
        ),
    )(inv, conv2d)
    return out, mask


def soft_erosion(x, weight, *, threshold=THRESHOLD, iterations=ITERATIONS):
    """Matches SoftErosion.forward.  x: (N, C, H, W).  Returns (out_f32, mask_bool)."""
    N, C, H, W = x.shape
    # PyTorch's F.conv2d(weight=(1,1,K,K), groups=C) is only valid for C == 1.
    assert C == 1, "SoftErosion's depthwise conv with a (1,1,K,K) weight needs C == 1"
    K = weight.shape[0]
    R = K // 2
    NC = N * C

    # Lane/sublane friendly padded extents (biggest single lever for small masks).
    He = _round_up(H, 8)
    We = _round_up(W, 128)
    T = 256 if We % 256 == 0 else 128           # column tile (MXU N dimension)
    Hp = _round_up(He + K - 1, 8)               # padded-input height (halo + tail)

    planes = x.astype(jnp.float32).reshape(NC, H, W)
    band = make_block_bands(weight.astype(jnp.float32), T)   # (K, 3, T, T) bf16

    # ---- generation-aware VMEM budgeting ------------------------------------
    cap = _vmem_capacity_bytes()
    usable = int(cap * 0.72)
    band_bytes = 2 * K * 3 * T * T * 2                       # double-buffered bf16
    per_plane1 = 2 * (Hp * We * 4 + He * We * 4) + 16 * He * T
    P = _largest_divisor_le(NC, min(64, max(1, (usable - band_bytes) // per_plane1)))
    needed1 = band_bytes + P * per_plane1 + (2 << 20)
    if needed1 > int(cap * 0.9):
        # TODO(synk): tile the conv pass along He as well for masks too large for
        # a single-plane block (not needed for typical mask sizes).
        raise ValueError(
            f"SoftErosion conv pass needs ~{needed1 >> 20} MiB VMEM "
            f"(capacity {cap >> 20} MiB); add He tiling.")
    vmem1 = int(min(max(needed1, 32 << 20), int(cap * 0.9)))

    rows = NC * He
    per_row2 = 2 * We * (4 + 4 + 1)                          # conv in + out + mask, x2 buffers
    rb_cap = max(8, (usable // per_row2) // 8 * 8)
    RB = 8 * _largest_divisor_le(rows // 8, rb_cap // 8)
    vmem2 = int(min(max(RB * per_row2 + (2 << 20), 32 << 20), int(cap * 0.9)))

    conv_kwargs = dict(H=H, W=W, He=He, We=We, Hp=Hp, K=K, T=T, P=P,
                       threshold=threshold, vmem_limit=vmem1)

    # Warm-up rounds (not taken for the module default iterations=1).
    # TODO(synk): fuse the jnp.minimum into the conv kernel for iterations > 1.
    for _ in range(iterations - 1):
        conv, _ = _conv_pass(planes, band, **conv_kwargs)
        planes = jnp.minimum(planes, conv[:, :H, :W])

    conv, bmax = _conv_pass(planes, band, **conv_kwargs)

    # Global max of sub-threshold conv values (tiny XLA reduce over per-block
    # vector maxima).  If every value is >= threshold this is -inf and
    # inv = -0.0, reproducing the reference's incidental `conv / -inf == -0`.
    denom = jnp.max(bmax)
    inv = (jnp.float32(1.0) / denom).reshape(1).astype(jnp.float32)

    out_p, mask_p = _finalize_pass(conv.reshape(rows, We), inv,
                                   threshold=threshold, RB=RB, vmem_limit=vmem2)
    out = out_p.reshape(NC, He, We)[:, :H, :W].reshape(N, C, H, W)
    mask = (mask_p.reshape(NC, He, We)[:, :H, :W] != 0).reshape(N, C, H, W)
    return out, mask


def _reference(x, weight, threshold):
    """Pure-JAX reference mirroring SoftErosion.forward (iterations == 1)."""
    x = x.astype(jnp.float32)
    K = weight.shape[0]
    R = K // 2
    conv = jax.lax.conv_general_dilated(
        x, weight[None, None].astype(jnp.float32),
        window_strides=(1, 1), padding=[(R, R), (R, R)],
        dimension_numbers=("NCHW", "OIHW", "NCHW"),
        precision=jax.lax.Precision.HIGHEST)
    mask = conv >= threshold
    denom = jnp.max(jnp.where(mask, -jnp.inf, conv))
    out = jnp.where(mask, 1.0, conv / denom)
    return out, mask, conv


if __name__ == "__main__":
    key = jax.random.PRNGKey(0)
    x = jax.random.uniform(key, (2, 1, 16, 16), dtype=jnp.float32) * 1.5
    weight = make_soft_erosion_weight(KERNEL_SIZE)

    fn = jax.jit(soft_erosion)
    out, mask = fn(x, weight)
    jax.block_until_ready((out, mask))

    assert out.shape == x.shape and out.dtype == jnp.float32
    assert mask.shape == x.shape and mask.dtype == jnp.bool_

    out_ref, mask_ref, conv_ref = _reference(x, weight, THRESHOLD)
    out_np, mask_np = np.asarray(out), np.asarray(mask)
    out_ref_np, mask_ref_np = np.asarray(out_ref), np.asarray(mask_ref)
    # bf16 MXU inputs + a different accumulation order than F.conv2d shift conv
    # values by O(1e-3); compare away from the 0.6 decision boundary and with a
    # matching tolerance.
    safe = np.abs(np.asarray(conv_ref) - THRESHOLD) > 1e-2
    assert np.array_equal(mask_np[safe], mask_ref_np[safe])
    np.testing.assert_allclose(out_np[safe], out_ref_np[safe], atol=4e-3, rtol=4e-3)

    print("KERNEL_OK")
</pallas_src>

<mosaic_0001>
module attributes {stable_mosaic.version = 11 : i64} {
  func.func @_conv_max_kernel(%arg0: i32, %arg1: memref<2x32x128xf32, #tpu.memory_space<vmem>>, %arg2: memref<15x3x128x128xbf16, #tpu.memory_space<vmem>>, %arg3: memref<2x16x128xf32, #tpu.memory_space<vmem>>, %arg4: memref<1x16x128xf32, #tpu.memory_space<vmem>>) attributes {dimension_semantics = [#tpu.dimension_semantics<parallel>], iteration_bounds = array<i64: 1>, scalar_prefetch = 0 : i64, scratch_operands = 0 : i64, tpu.core_type = #tpu.core_type<tc>, window_params = [{transform_indices = @transform_0, window_bounds = array<i64: 2, 32, 128>}, {pipeline_mode = #tpu.pipeline_mode<synchronous>, transform_indices = @transform_1, window_bounds = array<i64: 15, 3, 128, 128>}, {transform_indices = @transform_2, window_bounds = array<i64: 2, 16, 128>}, {transform_indices = @transform_3, window_bounds = array<i64: 1, 16, 128>}]} {
    %0 = tpu.iota {dimensions = array<i32: 0>} : vector<16x128xi32>
    %c16_i32 = arith.constant 16 : i32
    %1 = vector.broadcast %c16_i32 : i32 to vector<16x128xi32>
    %2 = arith.cmpi slt, %0, %1 : vector<16x128xi32>
    %3 = tpu.iota {dimensions = array<i32: 1>} : vector<16x128xi32>
    %cst = arith.constant 0xFF800000 : f32
    %4 = vector.broadcast %cst : f32 to vector<16x128xf32>
    %cst_0 = arith.constant 0.000000e+00 : f32
    %5 = vector.broadcast %cst_0 : f32 to vector<32x128xf32>
    %c0 = arith.constant 0 : index
    %c0_1 = arith.constant 0 : index
    %c0_2 = arith.constant 0 : index
    %6 = vector.load %arg1[%c0, %c0_1, %c0_2] : memref<2x32x128xf32, #tpu.memory_space<vmem>>, vector<2x16x128xf32>
    %7 = vector.shape_cast %6 : vector<2x16x128xf32> to vector<32x128xf32>
    %8 = arith.truncf %7 : vector<32x128xf32> to vector<32x128xbf16>
    %c0_3 = arith.constant 0 : index
    %c1 = arith.constant 1 : index
    %c0_4 = arith.constant 0 : index
    %c0_5 = arith.constant 0 : index
    %9 = vector.load %arg2[%c0_3, %c1, %c0_4, %c0_5] : memref<15x3x128x128xbf16, #tpu.memory_space<vmem>>, vector<1x1x128x128xbf16>
    %10 = vector.shape_cast %9 : vector<1x1x128x128xbf16> to vector<128x128xbf16>
    %cst_6 = arith.constant dense<0.000000e+00> : vector<32x128xf32>
    %11 = tpu.matmul %8, %10, %cst_6 {dimension_numbers = #tpu.dot_dimension_numbers<[1], [0], [0], [1], [0, 0, 1, 1], [], []>} : vector<32x128xbf16>, vector<128x128xbf16>, vector<32x128xf32> -> vector<32x128xf32>
    %12 = arith.addf %5, %11 : vector<32x128xf32>
    %c0_7 = arith.constant 0 : index
    %c1_8 = arith.constant 1 : index
    %c0_9 = arith.constant 0 : index
    %13 = vector.load %arg1[%c0_7, %c1_8, %c0_9] : memref<2x32x128xf32, #tpu.memory_space<vmem>>, vector<2x16x128xf32>
    %14 = vector.shape_cast %13 : vector<2x16x128xf32> to vector<32x128xf32>
    %15 = arith.truncf %14 : vector<32x128xf32> to vector<32x128xbf16>
    %c1_10 = arith.constant 1 : index
    %c1_11 = arith.constant 1 : index
    %c0_12 = arith.constant 0 : index
    %c0_13 = arith.constant 0 : index
    %16 = vector.load %arg2[%c1_10, %c1_11, %c0_12, %c0_13] : memref<15x3x128x128xbf16, #tpu.memory_space<vmem>>, vector<1x1x128x128xbf16>
    %17 = vector.shape_cast %16 : vector<1x1x128x128xbf16> to vector<128x128xbf16>
    %cst_14 = arith.constant dense<0.000000e+00> : vector<32x128xf32>
    %18 = tpu.matmul %15, %17, %cst_14 {dimension_numbers = #tpu.dot_dimension_numbers<[1], [0], [0], [1], [0, 0, 1, 1], [], []>} : vector<32x128xbf16>, vector<128x128xbf16>, vector<32x128xf32> -> vector<32x128xf32>
    %19 = arith.addf %12, %18 : vector<32x128xf32>
    %c0_15 = arith.constant 0 : index
    %c2 = arith.constant 2 : index
    %c0_16 = arith.constant 0 : index
    %20 = vector.load %arg1[%c0_15, %c2, %c0_16] : memref<2x32x128xf32, #tpu.memory_space<vmem>>, vector<2x16x128xf32>
    %21 = vector.shape_cast %20 : vector<2x16x128xf32> to vector<32x128xf32>
    %22 = arith.truncf %21 : vector<32x128xf32> to vector<32x128xbf16>
    %c2_17 = arith.constant 2 : index
    %c1_18 = arith.constant 1 : index
    %c0_19 = arith.constant 0 : index
    %c0_20 = arith.constant 0 : index
    %23 = vector.load %arg2[%c2_17, %c1_18, %c0_19, %c0_20] : memref<15x3x128x128xbf16, #tpu.memory_space<vmem>>, vector<1x1x128x128xbf16>
    %24 = vector.shape_cast %23 : vector<1x1x128x128xbf16> to vector<128x128xbf16>
    %cst_21 = arith.constant dense<0.000000e+00> : vector<32x128xf32>
    %25 = tpu.matmul %22, %24, %cst_21 {dimension_numbers = #tpu.dot_dimension_numbers<[1], [0], [0], [1], [0, 0, 1, 1], [], []>} : vector<32x128xbf16>, vector<128x128xbf16>, vector<32x128xf32> -> vector<32x128xf32>
    %26 = arith.addf %19, %25 : vector<32x128xf32>
    %c0_22 = arith.constant 0 : index
    %c3 = arith.constant 3 : index
    %c0_23 = arith.constant 0 : index
    %27 = vector.load %arg1[%c0_22, %c3, %c0_23] : memref<2x32x128xf32, #tpu.memory_space<vmem>>, vector<2x16x128xf32>
    %28 = vector.shape_cast %27 : vector<2x16x128xf32> to vector<32x128xf32>
    %29 = arith.truncf %28 : vector<32x128xf32> to vector<32x128xbf16>
    %c3_24 = arith.constant 3 : index
    %c1_25 = arith.constant 1 : index
    %c0_26 = arith.constant 0 : index
    %c0_27 = arith.constant 0 : index
    %30 = vector.load %arg2[%c3_24, %c1_25, %c0_26, %c0_27] : memref<15x3x128x128xbf16, #tpu.memory_space<vmem>>, vector<1x1x128x128xbf16>
    %31 = vector.shape_cast %30 : vector<1x1x128x128xbf16> to vector<128x128xbf16>
    %cst_28 = arith.constant dense<0.000000e+00> : vector<32x128xf32>
    %32 = tpu.matmul %29, %31, %cst_28 {dimension_numbers = #tpu.dot_dimension_numbers<[1], [0], [0], [1], [0, 0, 1, 1], [], []>} : vector<32x128xbf16>, vector<128x128xbf16>, vector<32x128xf32> -> vector<32x128xf32>
    %33 = arith.addf %26, %32 : vector<32x128xf32>
    %c0_29 = arith.constant 0 : index
    %c4 = arith.constant 4 : index
    %c0_30 = arith.constant 0 : index
    %34 = vector.load %arg1[%c0_29, %c4, %c0_30] : memref<2x32x128xf32, #tpu.memory_space<vmem>>, vector<2x16x128xf32>
    %35 = vector.shape_cast %34 : vector<2x16x128xf32> to vector<32x128xf32>
    %36 = arith.truncf %35 : vector<32x128xf32> to vector<32x128xbf16>
    %c4_31 = arith.constant 4 : index
    %c1_32 = arith.constant 1 : index
    %c0_33 = arith.constant 0 : index
    %c0_34 = arith.constant 0 : index
    %37 = vector.load %arg2[%c4_31, %c1_32, %c0_33, %c0_34] : memref<15x3x128x128xbf16, #tpu.memory_space<vmem>>, vector<1x1x128x128xbf16>
    %38 = vector.shape_cast %37 : vector<1x1x128x128xbf16> to vector<128x128xbf16>
    %cst_35 = arith.constant dense<0.000000e+00> : vector<32x128xf32>
    %39 = tpu.matmul %36, %38, %cst_35 {dimension_numbers = #tpu.dot_dimension_numbers<[1], [0], [0], [1], [0, 0, 1, 1], [], []>} : vector<32x128xbf16>, vector<128x128xbf16>, vector<32x128xf32> -> vector<32x128xf32>
    %40 = arith.addf %33, %39 : vector<32x128xf32>
    %c0_36 = arith.constant 0 : index
    %c5 = arith.constant 5 : index
    %c0_37 = arith.constant 0 : index
    %41 = vector.load %arg1[%c0_36, %c5, %c0_37] : memref<2x32x128xf32, #tpu.memory_space<vmem>>, vector<2x16x128xf32>
    %42 = vector.shape_cast %41 : vector<2x16x128xf32> to vector<32x128xf32>
    %43 = arith.truncf %42 : vector<32x128xf32> to vector<32x128xbf16>
    %c5_38 = arith.constant 5 : index
    %c1_39 = arith.constant 1 : index
    %c0_40 = arith.constant 0 : index
    %c0_41 = arith.constant 0 : index
    %44 = vector.load %arg2[%c5_38, %c1_39, %c0_40, %c0_41] : memref<15x3x128x128xbf16, #tpu.memory_space<vmem>>, vector<1x1x128x128xbf16>
    %45 = vector.shape_cast %44 : vector<1x1x128x128xbf16> to vector<128x128xbf16>
    %cst_42 = arith.constant dense<0.000000e+00> : vector<32x128xf32>
    %46 = tpu.matmul %43, %45, %cst_42 {dimension_numbers = #tpu.dot_dimension_numbers<[1], [0], [0], [1], [0, 0, 1, 1], [], []>} : vector<32x128xbf16>, vector<128x128xbf16>, vector<32x128xf32> -> vector<32x128xf32>
    %47 = arith.addf %40, %46 : vector<32x128xf32>
    %c0_43 = arith.constant 0 : index
    %c6 = arith.constant 6 : index
    %c0_44 = arith.constant 0 : index
    %48 = vector.load %arg1[%c0_43, %c6, %c0_44] : memref<2x32x128xf32, #tpu.memory_space<vmem>>, vector<2x16x128xf32>
    %49 = vector.shape_cast %48 : vector<2x16x128xf32> to vector<32x128xf32>
    %50 = arith.truncf %49 : vector<32x128xf32> to vector<32x128xbf16>
    %c6_45 = arith.constant 6 : index
    %c1_46 = arith.constant 1 : index
    %c0_47 = arith.constant 0 : index
    %c0_48 = arith.constant 0 : index
    %51 = vector.load %arg2[%c6_45, %c1_46, %c0_47, %c0_48] : memref<15x3x128x128xbf16, #tpu.memory_space<vmem>>, vector<1x1x128x128xbf16>
    %52 = vector.shape_cast %51 : vector<1x1x128x128xbf16> to vector<128x128xbf16>
    %cst_49 = arith.constant dense<0.000000e+00> : vector<32x128xf32>
    %53 = tpu.matmul %50, %52, %cst_49 {dimension_numbers = #tpu.dot_dimension_numbers<[1], [0], [0], [1], [0, 0, 1, 1], [], []>} : vector<32x128xbf16>, vector<128x128xbf16>, vector<32x128xf32> -> vector<32x128xf32>
    %54 = arith.addf %47, %53 : vector<32x128xf32>
    %c0_50 = arith.constant 0 : index
    %c7 = arith.constant 7 : index
    %c0_51 = arith.constant 0 : index
    %55 = vector.load %arg1[%c0_50, %c7, %c0_51] : memref<2x32x128xf32, #tpu.memory_space<vmem>>, vector<2x16x128xf32>
    %56 = vector.shape_cast %55 : vector<2x16x128xf32> to vector<32x128xf32>
    %57 = arith.truncf %56 : vector<32x128xf32> to vector<32x128xbf16>
    %c7_52 = arith.constant 7 : index
    %c1_53 = arith.constant 1 : index
    %c0_54 = arith.constant 0 : index
    %c0_55 = arith.constant 0 : index
    %58 = vector.load %arg2[%c7_52, %c1_53, %c0_54, %c0_55] : memref<15x3x128x128xbf16, #tpu.memory_space<vmem>>, vector<1x1x128x128xbf16>
    %59 = vector.shape_cast %58 : vector<1x1x128x128xbf16> to vector<128x128xbf16>
    %cst_56 = arith.constant dense<0.000000e+00> : vector<32x128xf32>
    %60 = tpu.matmul %57, %59, %cst_56 {dimension_numbers = #tpu.dot_dimension_numbers<[1], [0], [0], [1], [0, 0, 1, 1], [], []>} : vector<32x128xbf16>, vector<128x128xbf16>, vector<32x128xf32> -> vector<32x128xf32>
    %61 = arith.addf %54, %60 : vector<32x128xf32>
    %c0_57 = arith.constant 0 : index
    %c8 = arith.constant 8 : index
    %c0_58 = arith.constant 0 : index
    %62 = vector.load %arg1[%c0_57, %c8, %c0_58] : memref<2x32x128xf32, #tpu.memory_space<vmem>>, vector<2x16x128xf32>
    %63 = vector.shape_cast %62 : vector<2x16x128xf32> to vector<32x128xf32>
    %64 = arith.truncf %63 : vector<32x128xf32> to vector<32x128xbf16>
    %c8_59 = arith.constant 8 : index
    %c1_60 = arith.constant 1 : index
    %c0_61 = arith.constant 0 : index
    %c0_62 = arith.constant 0 : index
    %65 = vector.load %arg2[%c8_59, %c1_60, %c0_61, %c0_62] : memref<15x3x128x128xbf16, #tpu.memory_space<vmem>>, vector<1x1x128x128xbf16>
    %66 = vector.shape_cast %65 : vector<1x1x128x128xbf16> to vector<128x128xbf16>
    %cst_63 = arith.constant dense<0.000000e+00> : vector<32x128xf32>
    %67 = tpu.matmul %64, %66, %cst_63 {dimension_numbers = #tpu.dot_dimension_numbers<[1], [0], [0], [1], [0, 0, 1, 1], [], []>} : vector<32x128xbf16>, vector<128x128xbf16>, vector<32x128xf32> -> vector<32x128xf32>
    %68 = arith.addf %61, %67 : vector<32x128xf32>
    %c0_64 = arith.constant 0 : index
    %c9 = arith.constant 9 : index
    %c0_65 = arith.constant 0 : index
    %69 = vector.load %arg1[%c0_64, %c9, %c0_65] : memref<2x32x128xf32, #tpu.memory_space<vmem>>, vector<2x16x128xf32>
    %70 = vector.shape_cast %69 : vector<2x16x128xf32> to vector<32x128xf32>
    %71 = arith.truncf %70 : vector<32x128xf32> to vector<32x128xbf16>
    %c9_66 = arith.constant 9 : index
    %c1_67 = arith.constant 1 : index
    %c0_68 = arith.constant 0 : index
    %c0_69 = arith.constant 0 : index
    %72 = vector.load %arg2[%c9_66, %c1_67, %c0_68, %c0_69] : memref<15x3x128x128xbf16, #tpu.memory_space<vmem>>, vector<1x1x128x128xbf16>
    %73 = vector.shape_cast %72 : vector<1x1x128x128xbf16> to vector<128x128xbf16>
    %cst_70 = arith.constant dense<0.000000e+00> : vector<32x128xf32>
    %74 = tpu.matmul %71, %73, %cst_70 {dimension_numbers = #tpu.dot_dimension_numbers<[1], [0], [0], [1], [0, 0, 1, 1], [], []>} : vector<32x128xbf16>, vector<128x128xbf16>, vector<32x128xf32> -> vector<32x128xf32>
    %75 = arith.addf %68, %74 : vector<32x128xf32>
    %c0_71 = arith.constant 0 : index
    %c10 = arith.constant 10 : index
    %c0_72 = arith.constant 0 : index
    %76 = vector.load %arg1[%c0_71, %c10, %c0_72] : memref<2x32x128xf32, #tpu.memory_space<vmem>>, vector<2x16x128xf32>
    %77 = vector.shape_cast %76 : vector<2x16x128xf32> to vector<32x128xf32>
    %78 = arith.truncf %77 : vector<32x128xf32> to vector<32x128xbf16>
    %c10_73 = arith.constant 10 : index
    %c1_74 = arith.constant 1 : index
    %c0_75 = arith.constant 0 : index
    %c0_76 = arith.constant 0 : index
    %79 = vector.load %arg2[%c10_73, %c1_74, %c0_75, %c0_76] : memref<15x3x128x128xbf16, #tpu.memory_space<vmem>>, vector<1x1x128x128xbf16>
    %80 = vector.shape_cast %79 : vector<1x1x128x128xbf16> to vector<128x128xbf16>
    %cst_77 = arith.constant dense<0.000000e+00> : vector<32x128xf32>
    %81 = tpu.matmul %78, %80, %cst_77 {dimension_numbers = #tpu.dot_dimension_numbers<[1], [0], [0], [1], [0, 0, 1, 1], [], []>} : vector<32x128xbf16>, vector<128x128xbf16>, vector<32x128xf32> -> vector<32x128xf32>
    %82 = arith.addf %75, %81 : vector<32x128xf32>
    %c0_78 = arith.constant 0 : index
    %c11 = arith.constant 11 : index
    %c0_79 = arith.constant 0 : index
    %83 = vector.load %arg1[%c0_78, %c11, %c0_79] : memref<2x32x128xf32, #tpu.memory_space<vmem>>, vector<2x16x128xf32>
    %84 = vector.shape_cast %83 : vector<2x16x128xf32> to vector<32x128xf32>
    %85 = arith.truncf %84 : vector<32x128xf32> to vector<32x128xbf16>
    %c11_80 = arith.constant 11 : index
    %c1_81 = arith.constant 1 : index
    %c0_82 = arith.constant 0 : index
    %c0_83 = arith.constant 0 : index
    %86 = vector.load %arg2[%c11_80, %c1_81, %c0_82, %c0_83] : memref<15x3x128x128xbf16, #tpu.memory_space<vmem>>, vector<1x1x128x128xbf16>
    %87 = vector.shape_cast %86 : vector<1x1x128x128xbf16> to vector<128x128xbf16>
    %cst_84 = arith.constant dense<0.000000e+00> : vector<32x128xf32>
    %88 = tpu.matmul %85, %87, %cst_84 {dimension_numbers = #tpu.dot_dimension_numbers<[1], [0], [0], [1], [0, 0, 1, 1], [], []>} : vector<32x128xbf16>, vector<128x128xbf16>, vector<32x128xf32> -> vector<32x128xf32>
    %89 = arith.addf %82, %88 : vector<32x128xf32>
    %c0_85 = arith.constant 0 : index
    %c12 = arith.constant 12 : index
    %c0_86 = arith.constant 0 : index
    %90 = vector.load %arg1[%c0_85, %c12, %c0_86] : memref<2x32x128xf32, #tpu.memory_space<vmem>>, vector<2x16x128xf32>
    %91 = vector.shape_cast %90 : vector<2x16x128xf32> to vector<32x128xf32>
    %92 = arith.truncf %91 : vector<32x128xf32> to vector<32x128xbf16>
    %c12_87 = arith.constant 12 : index
    %c1_88 = arith.constant 1 : index
    %c0_89 = arith.constant 0 : index
    %c0_90 = arith.constant 0 : index
    %93 = vector.load %arg2[%c12_87, %c1_88, %c0_89, %c0_90] : memref<15x3x128x128xbf16, #tpu.memory_space<vmem>>, vector<1x1x128x128xbf16>
    %94 = vector.shape_cast %93 : vector<1x1x128x128xbf16> to vector<128x128xbf16>
    %cst_91 = arith.constant dense<0.000000e+00> : vector<32x128xf32>
    %95 = tpu.matmul %92, %94, %cst_91 {dimension_numbers = #tpu.dot_dimension_numbers<[1], [0], [0], [1], [0, 0, 1, 1], [], []>} : vector<32x128xbf16>, vector<128x128xbf16>, vector<32x128xf32> -> vector<32x128xf32>
    %96 = arith.addf %89, %95 : vector<32x128xf32>
    %c0_92 = arith.constant 0 : index
    %c13 = arith.constant 13 : index
    %c0_93 = arith.constant 0 : index
    %97 = vector.load %arg1[%c0_92, %c13, %c0_93] : memref<2x32x128xf32, #tpu.memory_space<vmem>>, vector<2x16x128xf32>
    %98 = vector.shape_cast %97 : vector<2x16x128xf32> to vector<32x128xf32>
    %99 = arith.truncf %98 : vector<32x128xf32> to vector<32x128xbf16>
    %c13_94 = arith.constant 13 : index
    %c1_95 = arith.constant 1 : index
    %c0_96 = arith.constant 0 : index
    %c0_97 = arith.constant 0 : index
    %100 = vector.load %arg2[%c13_94, %c1_95, %c0_96, %c0_97] : memref<15x3x128x128xbf16, #tpu.memory_space<vmem>>, vector<1x1x128x128xbf16>
    %101 = vector.shape_cast %100 : vector<1x1x128x128xbf16> to vector<128x128xbf16>
    %cst_98 = arith.constant dense<0.000000e+00> : vector<32x128xf32>
    %102 = tpu.matmul %99, %101, %cst_98 {dimension_numbers = #tpu.dot_dimension_numbers<[1], [0], [0], [1], [0, 0, 1, 1], [], []>} : vector<32x128xbf16>, vector<128x128xbf16>, vector<32x128xf32> -> vector<32x128xf32>
    %103 = arith.addf %96, %102 : vector<32x128xf32>
    %c0_99 = arith.constant 0 : index
    %c14 = arith.constant 14 : index
    %c0_100 = arith.constant 0 : index
    %104 = vector.load %arg1[%c0_99, %c14, %c0_100] : memref<2x32x128xf32, #tpu.memory_space<vmem>>, vector<2x16x128xf32>
    %105 = vector.shape_cast %104 : vector<2x16x128xf32> to vector<32x128xf32>
    %106 = arith.truncf %105 : vector<32x128xf32> to vector<32x128xbf16>
    %c14_101 = arith.constant 14 : index
    %c1_102 = arith.constant 1 : index
    %c0_103 = arith.constant 0 : index
    %c0_104 = arith.constant 0 : index
    %107 = vector.load %arg2[%c14_101, %c1_102, %c0_103, %c0_104] : memref<15x3x128x128xbf16, #tpu.memory_space<vmem>>, vector<1x1x128x128xbf16>
    %108 = vector.shape_cast %107 : vector<1x1x128x128xbf16> to vector<128x128xbf16>
    %cst_105 = arith.constant dense<0.000000e+00> : vector<32x128xf32>
    %109 = tpu.matmul %106, %108, %cst_105 {dimension_numbers = #tpu.dot_dimension_numbers<[1], [0], [0], [1], [0, 0, 1, 1], [], []>} : vector<32x128xbf16>, vector<128x128xbf16>, vector<32x128xf32> -> vector<32x128xf32>
    %110 = arith.addf %103, %109 : vector<32x128xf32>
    %111 = vector.shape_cast %110 : vector<32x128xf32> to vector<2x16x128xf32>
    %c0_106 = arith.constant 0 : index
    %c0_107 = arith.constant 0 : index
    %c0_108 = arith.constant 0 : index
    %112 = vector.load %arg3[%c0_106, %c0_107, %c0_108] : memref<2x16x128xf32, #tpu.memory_space<vmem>>, vector<2x16x128xf32>
    tpu.vector_store %arg3[%c0_106, %c0_107, %c0_108], %111 {strides = array<i32>} : memref<2x16x128xf32, #tpu.memory_space<vmem>>, vector<2x16x128xf32>,
    %c16_i32_109 = arith.constant 16 : i32
    %113 = vector.broadcast %c16_i32_109 : i32 to vector<16x128xi32>
    %114 = arith.cmpi slt, %3, %113 : vector<16x128xi32>
    %115 = arith.andi %2, %114 : vector<16x128xi1>
    %cst_110 = arith.constant 6.000000e-01 : f32
    %116 = vector.broadcast %cst_110 : f32 to vector<2x16x128xf32>
    %117 = arith.cmpf olt, %111, %116 : vector<2x16x128xf32>
    %118 = vector.shape_cast %115 : vector<16x128xi1> to vector<1x16x128xi1>
    %119 = vector.broadcast %118 : vector<1x16x128xi1> to vector<2x16x128xi1>
    %120 = arith.andi %119, %117 : vector<2x16x128xi1>
    %cst_111 = arith.constant 0xFF800000 : f32
    %121 = vector.broadcast %cst_111 : f32 to vector<2x16x128xf32>
    %122 = arith.select %120, %111, %121 : vector<2x16x128xi1>, vector<2x16x128xf32>
    %cst_112 = arith.constant dense<0xFF800000> : vector<16x128xf32>
    %123 = vector.multi_reduction <maximumf>, %122, %cst_112 [0] : vector<2x16x128xf32> to vector<16x128xf32>
    %124 = arith.maximumf %4, %123 : vector<16x128xf32>
    %c0_113 = arith.constant 0 : index
    %c0_114 = arith.constant 0 : index
    %c0_115 = arith.constant 0 : index
    %125 = vector.load %arg4[%c0_113, %c0_114, %c0_115] : memref<1x16x128xf32, #tpu.memory_space<vmem>>, vector<1x16x128xf32>
    %126 = vector.shape_cast %125 : vector<1x16x128xf32> to vector<16x128xf32>
    %127 = vector.shape_cast %124 : vector<16x128xf32> to vector<1x16x128xf32>
    tpu.vector_store %arg4[%c0_113, %c0_114, %c0_115], %127 {strides = array<i32>} : memref<1x16x128xf32, #tpu.memory_space<vmem>>, vector<1x16x128xf32>,
    return
  }
  func.func @transform_0(%arg0: i32) -> (i32, i32, i32) {
    %c0_i32 = arith.constant 0 : i32
    %c0_i32_0 = arith.constant 0 : i32
    %c0_i32_1 = arith.constant 0 : i32
    return %arg0, %c0_i32, %c0_i32_0 : i32, i32, i32
  }
  func.func @transform_1(%arg0: i32) -> (i32, i32, i32, i32) {
    %c0_i32 = arith.constant 0 : i32
    %c0_i32_0 = arith.constant 0 : i32
    %c0_i32_1 = arith.constant 0 : i32
    %c0_i32_2 = arith.constant 0 : i32
    %c0_i32_3 = arith.constant 0 : i32
    return %c0_i32, %c0_i32_0, %c0_i32_1, %c0_i32_2 : i32, i32, i32, i32
  }
  func.func @transform_2(%arg0: i32) -> (i32, i32, i32) {
    %c0_i32 = arith.constant 0 : i32
    %c0_i32_0 = arith.constant 0 : i32
    %c0_i32_1 = arith.constant 0 : i32
    return %arg0, %c0_i32, %c0_i32_0 : i32, i32, i32
  }
  func.func @transform_3(%arg0: i32) -> (i32, i32, i32) {
    %c0_i32 = arith.constant 0 : i32
    %c0_i32_0 = arith.constant 0 : i32
    %c0_i32_1 = arith.constant 0 : i32
    return %arg0, %c0_i32, %c0_i32_0 : i32, i32, i32
  }
}

module attributes {stable_mosaic.version = 11 : i64} {
  func.func @_finalize_kernel(%arg0: i32, %arg1: memref<1xf32, #tpu.memory_space<smem>>, %arg2: memref<32x128xf32, #tpu.memory_space<vmem>>, %arg3: memref<32x128xf32, #tpu.memory_space<vmem>>, %arg4: memref<32x128xi8, #tpu.memory_space<vmem>>) attributes {dimension_semantics = [#tpu.dimension_semantics<parallel>], iteration_bounds = array<i64: 1>, scalar_prefetch = 0 : i64, scratch_operands = 0 : i64, tpu.core_type = #tpu.core_type<tc>, window_params = [{transform_indices = @transform_0, window_bounds = array<i64: 1>}, {transform_indices = @transform_1, window_bounds = array<i64: 32, 128>}, {transform_indices = @transform_2, window_bounds = array<i64: 32, 128>}, {transform_indices = @transform_3, window_bounds = array<i64: 32, 128>}]} {
    %c0 = arith.constant 0 : index
    %c0_0 = arith.constant 0 : index
    %0 = vector.load %arg2[%c0, %c0_0] : memref<32x128xf32, #tpu.memory_space<vmem>>, vector<32x128xf32>
    %cst = arith.constant 6.000000e-01 : f32
    %1 = vector.broadcast %cst : f32 to vector<32x128xf32>
    %2 = arith.cmpf oge, %0, %1 : vector<32x128xf32>
    %c0_1 = arith.constant 0 : index
    %3 = memref.load %arg1[%c0_1] : memref<1xf32, #tpu.memory_space<smem>>
    %4 = vector.broadcast %3 : f32 to vector<32x128xf32>
    %5 = arith.mulf %0, %4 : vector<32x128xf32>
    %cst_2 = arith.constant 1.000000e+00 : f32
    %6 = vector.broadcast %cst_2 : f32 to vector<32x128xf32>
    %7 = arith.select %2, %6, %5 : vector<32x128xi1>, vector<32x128xf32>
    %c0_3 = arith.constant 0 : index
    %c0_4 = arith.constant 0 : index
    %8 = vector.load %arg3[%c0_3, %c0_4] : memref<32x128xf32, #tpu.memory_space<vmem>>, vector<32x128xf32>
    tpu.vector_store %arg3[%c0_3, %c0_4], %7 {strides = array<i32>} : memref<32x128xf32, #tpu.memory_space<vmem>>, vector<32x128xf32>,
    %9 = arith.extui %2 : vector<32x128xi1> to vector<32x128xi8>
    %c0_5 = arith.constant 0 : index
    %c0_6 = arith.constant 0 : index
    %10 = vector.load %arg4[%c0_5, %c0_6] : memref<32x128xi8, #tpu.memory_space<vmem>>, vector<32x128xi8>
    tpu.vector_store %arg4[%c0_5, %c0_6], %9 {strides = array<i32>} : memref<32x128xi8, #tpu.memory_space<vmem>>, vector<32x128xi8>,
    return
  }
  func.func @transform_0(%arg0: i32) -> i32 {
    %c0_i32 = arith.constant 0 : i32
    %c0_i32_0 = arith.constant 0 : i32
    return %c0_i32 : i32
  }
  func.func @transform_1(%arg0: i32) -> (i32, i32) {
    %c0_i32 = arith.constant 0 : i32
    %c0_i32_0 = arith.constant 0 : i32
    return %arg0, %c0_i32 : i32, i32
  }
  func.func @transform_2(%arg0: i32) -> (i32, i32) {
    %c0_i32 = arith.constant 0 : i32
    %c0_i32_0 = arith.constant 0 : i32
    return %arg0, %c0_i32 : i32, i32
  }
  func.func @transform_3(%arg0: i32) -> (i32, i32) {
    %c0_i32 = arith.constant 0 : i32
    %c0_i32_0 = arith.constant 0 : i32
    return %arg0, %c0_i32 : i32, i32
  }
}

</mosaic_0001>

<llo_original>
// kernel: soft_erosion.3
$region0: #{soft_erosion.3}
  #allocation0 [shape = 'u32[]', space=smem, size = 0x4, offset = 0x4, fixed_abs, tag = 'smem constant byte address 0x4 - core index']
  #allocation1 [shape = 'u32[144,128]{1,0:T(1,128)}', space=vmem, size = 0x12000, scoped, tag = 'internal scratch']
  #allocation2 [shape = 'f32[1]{0:T(128)S(6)}', space=smem, size = 0x200, scoped, tag = 'scoped memory for soft_erosion.3']
  %s0 = inlined_call_operand.<no memory space> [shape: f32[1], index: 0, kind: input, shape index: {}]
  %s1 = inlined_call_operand.vmem [shape: f32[32,128], index: 1, kind: input, shape index: {}]
  %s2 = inlined_call_operand.vmem [shape: f32[32,128], index: 2, kind: output, shape index: {0}]
  %s3 = inlined_call_operand.vmem [shape: s8[32,128], index: 3, kind: output, shape index: {1}]
  %4 = xla_tuple %s2, %s3
  %s5 = sld [smem:[#allocation0]]
  $region26: #{soft_erosion.3} parent=0
    _
  %s7 = ssub.s32 1, %s5
  %s8 = scalar_select 0, %s7, %s5
  %9 = sst [smem:[#allocation2]] %s0
  // Predicated region
  $region2: #{soft_erosion.3} parent=0 // pred_check
    _
  $region3: #{soft_erosion.3} parent=0 // pred_check_branch
    %11 = sbr.rel (0) target = $region5
  $region4: #{soft_erosion.3} parent=0 // pred_region
    _
  $region5: #{soft_erosion.3} parent=0 // pred_fallthru
    _
  // Predicated region
  $region6: #{soft_erosion.3} parent=0 // pred_check
    _
  $region7: #{soft_erosion.3} parent=0 // pred_check_branch
    %13 = sbr.rel (0) target = $region9
  $region8: #{soft_erosion.3} parent=0 // pred_region
    _
  $region9: #{soft_erosion.3} parent=0 // pred_fallthru
    _
  %v16 = vld [vmem:[%s1] sm:$0xff]
  %v17 = vld [vmem:[%s1 + $0x8] sm:$0xff]
  %v18 = vld [vmem:[%s1 + $0x10] sm:$0xff]
  %v19 = vld [vmem:[%s1 + $0x18] sm:$0xff]
  %vm20 = vcmp.ge.f32.partialorder %v16, 0.6
  %vm21 = vcmp.ge.f32.partialorder %v17, 0.6
  %vm22 = vcmp.ge.f32.partialorder %v18, 0.6
  %vm23 = vcmp.ge.f32.partialorder %v19, 0.6
  %s24 = sld [smem:[#allocation2]]
  %v25 = vstv %s24
  %v26 = vmul.f32 %v16, %v25
  %v27 = vmul.f32 %v17, %v25
  %v28 = vmul.f32 %v18, %v25
  %v29 = vmul.f32 %v19, %v25
  %v30 = vsel %vm20, 1.0, %v26
  %v31 = vsel %vm21, 1.0, %v27
  %v32 = vsel %vm22, 1.0, %v28
  %v33 = vsel %vm23, 1.0, %v29
  %34 = vst [vmem:[%s2] sm:$0xff] %v30
  %35 = vst [vmem:[%s2 + $0x8] sm:$0xff] %v31
  %36 = vst [vmem:[%s2 + $0x10] sm:$0xff] %v32
  %37 = vst [vmem:[%s2 + $0x18] sm:$0xff] %v33
  %vm38 = vmpackc.low %vm21, %vm20
  %vm39 = vmpackc.low %vm23, %vm22
  %vm40 = vmpackc.even %vm39, %vm38
  %v41 = vsel %vm40, 16843009, 0
  %v42 = vunpack.c.0.s8 %v41
  %v43 = vunpack.c.1.s8 %v41
  %v44 = vunpack.c.2.s8 %v41
  %v45 = vunpack.c.3.s8 %v41
  %v46 = vpack.c.b16 %v42, %v42
  %v47 = vpack.c.b8 %v46, %v46
  %v48 = vpack.c.b16 %v43, %v43
  %v49 = vpack.c.b8 %v48, %v48
  %v50 = vpack.c.b16 %v44, %v44
  %v51 = vpack.c.b8 %v50, %v50
  %v52 = vpack.c.b16 %v45, %v45
  %v53 = vpack.c.b8 %v52, %v52
  %54 = vst [vmem:[%s3] sm:$0x3] %v47
  %55 = vst [vmem:[%s3 + $0x2] sm:$0x3] %v49
  %56 = vst [vmem:[%s3 + $0x4] sm:$0x3] %v51
  %57 = vst [vmem:[%s3 + $0x6] sm:$0x3] %v53
  // Predicated region
  $region10: #{soft_erosion.3} parent=0 // pred_check
    _
  $region11: #{soft_erosion.3} parent=0 // pred_check_branch
    %59 = sbr.rel (0) target = $region13
  $region12: #{soft_erosion.3} parent=0 // pred_region
    _
  $region13: #{soft_erosion.3} parent=0 // pred_fallthru
    _
  // Predicated region
  $region14: #{soft_erosion.3} parent=0 // pred_check
    _
  $region15: #{soft_erosion.3} parent=0 // pred_check_branch
    %61 = sbr.rel (0) target = $region17
  $region16: #{soft_erosion.3} parent=0 // pred_region
    _
  $region17: #{soft_erosion.3} parent=0 // pred_fallthru
    _
  // Predicated region
  $region18: #{soft_erosion.3} parent=0 // pred_check
    _
  $region19: #{soft_erosion.3} parent=0 // pred_check_branch
    %63 = sbr.rel (0) target = $region21
  $region20: #{soft_erosion.3} parent=0 // pred_region
    _
  $region21: #{soft_erosion.3} parent=0 // pred_fallthru
    _
  // Predicated region
  $region22: #{soft_erosion.3} parent=0 // pred_check
    _
  $region23: #{soft_erosion.3} parent=0 // pred_check_branch
    %65 = sbr.rel (0) target = $region25
  $region24: #{soft_erosion.3} parent=0 // pred_region
    _
  $region25: #{soft_erosion.3} parent=0 // pred_fallthru
    _

// kernel: soft_erosion.2
$region0: #{soft_erosion.2}
  #allocation0 [shape = 'u32[]', space=smem, size = 0x4, offset = 0x4, fixed_abs, tag = 'smem constant byte address 0x4 - core index']
  #allocation1 [shape = 'u32[144,128]{1,0:T(1,128)}', space=vmem, size = 0x12000, scoped, tag = 'internal scratch']
  %s0 = inlined_call_operand.vmem [shape: f32[2,32,128], index: 0, kind: input, shape index: {}]
  %s1 = inlined_call_operand.vmem [shape: bf16[15,3,128,128], index: 1, kind: input, shape index: {}]
  %s2 = inlined_call_operand.vmem [shape: f32[2,16,128], index: 2, kind: output, shape index: {0}]
  %s3 = inlined_call_operand.vmem [shape: f32[1,16,128], index: 3, kind: output, shape index: {1}]
  %4 = xla_tuple %s2, %s3
  %s5 = sld [smem:[#allocation0]]
  $region26: #{soft_erosion.2} parent=0
    _
  %s7 = ssub.s32 1, %s5
  %s8 = scalar_select 0, %s7, %s5
  // Predicated region
  $region2: #{soft_erosion.2} parent=0 // pred_check
    _
  $region3: #{soft_erosion.2} parent=0 // pred_check_branch
    %10 = sbr.rel (0) target = $region5
  $region4: #{soft_erosion.2} parent=0 // pred_region
    _
  $region5: #{soft_erosion.2} parent=0 // pred_fallthru
    _
  // Predicated region
  $region6: #{soft_erosion.2} parent=0 // pred_check
    _
  $region7: #{soft_erosion.2} parent=0 // pred_check_branch
    %12 = sbr.rel (0) target = $region9
  $region8: #{soft_erosion.2} parent=0 // pred_region
    _
  $region9: #{soft_erosion.2} parent=0 // pred_fallthru
    _
  %v14 = vlaneseq
  %v15 = vshrl.u32 %v14, 7
  %v16 = vadd.s32 %v15, 8
  %vm17 = vcmp.lt.s32.totalorder %v15, 16
  %vm18 = vcmp.lt.s32.totalorder %v16, 16
  %v19 = vlaneseq
  %v20 = vand.u32 %v19, 127
  %v21 = vld [vmem:[%s0] sm:$0xff]
  %v22 = vld [vmem:[%s0 + $0x8] sm:$0xff]
  %v23 = vld [vmem:[%s0 + $0x20] sm:$0xff]
  %v24 = vld [vmem:[%s0 + $0x28] sm:$0xff]
  %v25 = vpack.c.bf16 %v22, %v21
  %v26 = vpack.c.bf16 %v24, %v23
  %s27 = scalar_lea.vmem %s1, 64
  %v28 = vld [vmem:[%s27] sm:$0xf]
  %v29 = vld [vmem:[%s27 + $0x4] sm:$0xf]
  %v30 = vld [vmem:[%s27 + $0x8] sm:$0xf]
  %v31 = vld [vmem:[%s27 + $0xc] sm:$0xf]
  %v32 = vld [vmem:[%s27 + $0x10] sm:$0xf]
  %v33 = vld [vmem:[%s27 + $0x14] sm:$0xf]
  %v34 = vld [vmem:[%s27 + $0x18] sm:$0xf]
  %v35 = vld [vmem:[%s27 + $0x1c] sm:$0xf]
  %v36 = vld [vmem:[%s27 + $0x20] sm:$0xf]
  %v37 = vld [vmem:[%s27 + $0x24] sm:$0xf]
  %v38 = vld [vmem:[%s27 + $0x28] sm:$0xf]
  %v39 = vld [vmem:[%s27 + $0x2c] sm:$0xf]
  %v40 = vld [vmem:[%s27 + $0x30] sm:$0xf]
  %v41 = vld [vmem:[%s27 + $0x34] sm:$0xf]
  %v42 = vld [vmem:[%s27 + $0x38] sm:$0xf]
  %v43 = vld [vmem:[%s27 + $0x3c] sm:$0xf]
  %v44 = vld [vmem:[%s0 + $0x1] sm:$0xff]
  %v45 = vld [vmem:[%s0 + $0x9] sm:$0xff]
  %v46 = vld [vmem:[%s0 + $0x21] sm:$0xff]
  %v47 = vld [vmem:[%s0 + $0x29] sm:$0xff]
  %v48 = vpack.c.bf16 %v45, %v44
  %v49 = vpack.c.bf16 %v47, %v46
  %s50 = scalar_lea.vmem %s1, 256
  %v51 = vld [vmem:[%s50] sm:$0xf]
  %v52 = vld [vmem:[%s50 + $0x4] sm:$0xf]
  %v53 = vld [vmem:[%s50 + $0x8] sm:$0xf]
  %v54 = vld [vmem:[%s50 + $0xc] sm:$0xf]
  %v55 = vld [vmem:[%s50 + $0x10] sm:$0xf]
  %v56 = vld [vmem:[%s50 + $0x14] sm:$0xf]
  %v57 = vld [vmem:[%s50 + $0x18] sm:$0xf]
  %v58 = vld [vmem:[%s50 + $0x1c] sm:$0xf]
  %v59 = vld [vmem:[%s50 + $0x20] sm:$0xf]
  %v60 = vld [vmem:[%s50 + $0x24] sm:$0xf]
  %v61 = vld [vmem:[%s50 + $0x28] sm:$0xf]
  %v62 = vld [vmem:[%s50 + $0x2c] sm:$0xf]
  %v63 = vld [vmem:[%s50 + $0x30] sm:$0xf]
  %v64 = vld [vmem:[%s50 + $0x34] sm:$0xf]
  %v65 = vld [vmem:[%s50 + $0x38] sm:$0xf]
  %v66 = vld [vmem:[%s50 + $0x3c] sm:$0xf]
  %v83 = vunpack.c.l.b16 %v51
  %v84 = vunpack.c.l.b16 %v52
  %v85 = vunpack.c.l.b16 %v53
  %v86 = vunpack.c.l.b16 %v54
  %v87 = vunpack.c.l.b16 %v55
  %v88 = vunpack.c.l.b16 %v56
  %v89 = vunpack.c.l.b16 %v57
  %v90 = vunpack.c.l.b16 %v58
  %v91 = vunpack.c.l.b16 %v59
  %v92 = vunpack.c.l.b16 %v60
  %v93 = vunpack.c.l.b16 %v61
  %v94 = vunpack.c.l.b16 %v62
  %v95 = vunpack.c.l.b16 %v63
  %v96 = vunpack.c.l.b16 %v64
  %v97 = vunpack.c.l.b16 %v65
  %v98 = vunpack.c.l.b16 %v66
  %v99 = vpack.c.b16 %v84, %v83
  %v100 = vpack.c.b16 %v86, %v85
  %v101 = vpack.c.b16 %v88, %v87
  %v102 = vpack.c.b16 %v90, %v89
  %v103 = vpack.c.b16 %v92, %v91
  %v104 = vpack.c.b16 %v94, %v93
  %v105 = vpack.c.b16 %v96, %v95
  %v106 = vpack.c.b16 %v98, %v97
  %115 = vmatprep.subr.bf16.mxu0 0
  %116 = vmatpush1.bf16.msra.mxu0 %v106
  %117 = vmatprep.subr.bf16.mxu0 0
  %118 = vmatpush1.bf16.msra.mxu0 %v105
  %119 = vmatprep.subr.bf16.mxu0 0
  %120 = vmatpush1.bf16.msra.mxu0 %v104
  %121 = vmatprep.subr.bf16.mxu0 0
  %122 = vmatpush1.bf16.msra.mxu0 %v103
  %123 = vmatprep.subr.bf16.mxu0 0
  %124 = vmatpush1.bf16.msra.mxu0 %v102
  %125 = vmatprep.subr.bf16.mxu0 0
  %126 = vmatpush1.bf16.msra.mxu0 %v101
  %127 = vmatprep.subr.bf16.mxu0 0
  %128 = vmatpush1.bf16.msra.mxu0 %v100
  %129 = vmatprep.subr.bf16.mxu0 0
  %130 = vmatpush1.bf16.msra.mxu0 %v99
  %131 = vmatprep.subr.bf16.mxu0 0
  %132 = vmatpush2.bf16.msra.mxu0 0
  %133 = vmatprep.subr.bf16.mxu0 0
  %134 = vmatpush2.bf16.msra.mxu0 0
  %135 = vmatprep.subr.bf16.mxu0 0
  %136 = vmatpush2.bf16.msra.mxu0 0
  %137 = vmatprep.subr.bf16.mxu0 0
  %138 = vmatpush2.bf16.msra.mxu0 0
  %139 = vmatprep.subr.bf16.mxu0 0
  %140 = vmatpush2.bf16.msra.mxu0 0
  %141 = vmatprep.subr.bf16.mxu0 0
  %142 = vmatpush2.bf16.msra.mxu0 0
  %143 = vmatprep.subr.bf16.mxu0 0
  %144 = vmatpush2.bf16.msra.mxu0 0
  %145 = vmatprep.subr.bf16.mxu0 0
  %146 = vmatpush2.bf16.msra.mxu0 0
  %147 = vmatprep.mubr.bf16.mxu0 0
  %148 = vmatmul.mubr.bf16.gmra.mxu0 %v48
  %v149 = vpop.f32.mrf.mxu0
  %v150 = vadd.f32 0.0, %v149
  %v151 = vpop.f32.mrf.mxu0
  %v152 = vpop.f32.mrf.mxu0
  %v153 = vadd.f32 0.0, %v152
  %v154 = vpop.f32.mrf.mxu0
  %155 = vmatprep.mubr.bf16.mxu0 0
  %156 = vmatmul.mubr.bf16.gmra.mxu0 %v49
  %v157 = vpop.f32.mrf.mxu0
  %v158 = vadd.f32 0.0, %v157
  %v159 = vpop.f32.mrf.mxu0
  %v160 = vpop.f32.mrf.mxu0
  %v161 = vadd.f32 0.0, %v160
  %v162 = vpop.f32.mrf.mxu0
  %163 = vdwg.mxu0
  %v180 = vunpack.c.l.b16 %v28
  %v181 = vunpack.c.l.b16 %v29
  %v182 = vunpack.c.l.b16 %v30
  %v183 = vunpack.c.l.b16 %v31
  %v184 = vunpack.c.l.b16 %v32
  %v185 = vunpack.c.l.b16 %v33
  %v186 = vunpack.c.l.b16 %v34
  %v187 = vunpack.c.l.b16 %v35
  %v188 = vunpack.c.l.b16 %v36
  %v189 = vunpack.c.l.b16 %v37
  %v190 = vunpack.c.l.b16 %v38
  %v191 = vunpack.c.l.b16 %v39
  %v192 = vunpack.c.l.b16 %v40
  %v193 = vunpack.c.l.b16 %v41
  %v194 = vunpack.c.l.b16 %v42
  %v195 = vunpack.c.l.b16 %v43
  %v196 = vpack.c.b16 %v181, %v180
  %v197 = vpack.c.b16 %v183, %v182
  %v198 = vpack.c.b16 %v185, %v184
  %v199 = vpack.c.b16 %v187, %v186
  %v200 = vpack.c.b16 %v189, %v188
  %v201 = vpack.c.b16 %v191, %v190
  %v202 = vpack.c.b16 %v193, %v192
  %v203 = vpack.c.b16 %v195, %v194
  %212 = vmatprep.subr.bf16.mxu0 0
  %213 = vmatpush1.bf16.msra.mxu0 %v203
  %214 = vmatprep.subr.bf16.mxu0 0
  %215 = vmatpush1.bf16.msra.mxu0 %v202
  %216 = vmatprep.subr.bf16.mxu0 0
  %217 = vmatpush1.bf16.msra.mxu0 %v201
  %218 = vmatprep.subr.bf16.mxu0 0
  %219 = vmatpush1.bf16.msra.mxu0 %v200
  %220 = vmatprep.subr.bf16.mxu0 0
  %221 = vmatpush1.bf16.msra.mxu0 %v199
  %222 = vmatprep.subr.bf16.mxu0 0
  %223 = vmatpush1.bf16.msra.mxu0 %v198
  %224 = vmatprep.subr.bf16.mxu0 0
  %225 = vmatpush1.bf16.msra.mxu0 %v197
  %226 = vmatprep.subr.bf16.mxu0 0
  %227 = vmatpush1.bf16.msra.mxu0 %v196
  %228 = vmatprep.subr.bf16.mxu0 0
  %229 = vmatpush2.bf16.msra.mxu0 0
  %230 = vmatprep.subr.bf16.mxu0 0
  %231 = vmatpush2.bf16.msra.mxu0 0
  %232 = vmatprep.subr.bf16.mxu0 0
  %233 = vmatpush2.bf16.msra.mxu0 0
  %234 = vmatprep.subr.bf16.mxu0 0
  %235 = vmatpush2.bf16.msra.mxu0 0
  %236 = vmatprep.subr.bf16.mxu0 0
  %237 = vmatpush2.bf16.msra.mxu0 0
  %238 = vmatprep.subr.bf16.mxu0 0
  %239 = vmatpush2.bf16.msra.mxu0 0
  %240 = vmatprep.subr.bf16.mxu0 0
  %241 = vmatpush2.bf16.msra.mxu0 0
  %242 = vmatprep.subr.bf16.mxu0 0
  %243 = vmatpush2.bf16.msra.mxu0 0
  %244 = vmatprep.mubr.bf16.mxu0 0
  %245 = vmatmul.mubr.bf16.gmra.mxu0 %v25
  %v246 = vpop.f32.mrf.mxu0
  %v247 = vadd.f32 %v150, %v246
  %v248 = vpop.f32.mrf.mxu0
  %v249 = vpop.f32.mrf.mxu0
  %v250 = vadd.f32 %v153, %v249
  %v251 = vpop.f32.mrf.mxu0
  %252 = vmatprep.mubr.bf16.mxu0 0
  %253 = vmatmul.mubr.bf16.gmra.mxu0 %v26
  %v254 = vpop.f32.mrf.mxu0
  %v255 = vadd.f32 %v158, %v254
  %v256 = vpop.f32.mrf.mxu0
  %v257 = vpop.f32.mrf.mxu0
  %v258 = vadd.f32 %v161, %v257
  %v259 = vpop.f32.mrf.mxu0
  %260 = vdwg.mxu0
  %v261 = vld [vmem:[%s0 + $0x2] sm:$0xff]
  %v262 = vld [vmem:[%s0 + $0xa] sm:$0xff]
  %v263 = vld [vmem:[%s0 + $0x22] sm:$0xff]
  %v264 = vld [vmem:[%s0 + $0x2a] sm:$0xff]
  %v265 = vpack.c.bf16 %v262, %v261
  %v266 = vpack.c.bf16 %v264, %v263
  %s267 = scalar_lea.vmem %s1, 448
  %v268 = vld [vmem:[%s267] sm:$0xf]
  %v269 = vld [vmem:[%s267 + $0x4] sm:$0xf]
  %v270 = vld [vmem:[%s267 + $0x8] sm:$0xf]
  %v271 = vld [vmem:[%s267 + $0xc] sm:$0xf]
  %v272 = vld [vmem:[%s267 + $0x10] sm:$0xf]
  %v273 = vld [vmem:[%s267 + $0x14] sm:$0xf]
  %v274 = vld [vmem:[%s267 + $0x18] sm:$0xf]
  %v275 = vld [vmem:[%s267 + $0x1c] sm:$0xf]
  %v276 = vld [vmem:[%s267 + $0x20] sm:$0xf]
  %v277 = vld [vmem:[%s267 + $0x24] sm:$0xf]
  %v278 = vld [vmem:[%s267 + $0x28] sm:$0xf]
  %v279 = vld [vmem:[%s267 + $0x2c] sm:$0xf]
  %v280 = vld [vmem:[%s267 + $0x30] sm:$0xf]
  %v281 = vld [vmem:[%s267 + $0x34] sm:$0xf]
  %v282 = vld [vmem:[%s267 + $0x38] sm:$0xf]
  %v283 = vld [vmem:[%s267 + $0x3c] sm:$0xf]
  %v300 = vunpack.c.l.b16 %v268
  %v301 = vunpack.c.l.b16 %v269
  %v302 = vunpack.c.l.b16 %v270
  %v303 = vunpack.c.l.b16 %v271
  %v304 = vunpack.c.l.b16 %v272
  %v305 = vunpack.c.l.b16 %v273
  %v306 = vunpack.c.l.b16 %v274
  %v307 = vunpack.c.l.b16 %v275
  %v308 = vunpack.c.l.b16 %v276
  %v309 = vunpack.c.l.b16 %v277
  %v310 = vunpack.c.l.b16 %v278
  %v311 = vunpack.c.l.b16 %v279
  %v312 = vunpack.c.l.b16 %v280
  %v313 = vunpack.c.l.b16 %v281
  %v314 = vunpack.c.l.b16 %v282
  %v315 = vunpack.c.l.b16 %v283
  %v316 = vpack.c.b16 %v301, %v300
  %v317 = vpack.c.b16 %v303, %v302
  %v318 = vpack.c.b16 %v305, %v304
  %v319 = vpack.c.b16 %v307, %v306
  %v320 = vpack.c.b16 %v309, %v308
  %v321 = vpack.c.b16 %v311, %v310
  %v322 = vpack.c.b16 %v313, %v312
  %v323 = vpack.c.b16 %v315, %v314
  %332 = vmatprep.subr.bf16.mxu0 0
  %333 = vmatpush1.bf16.msra.mxu0 %v323
  %334 = vmatprep.subr.bf16.mxu0 0
  %335 = vmatpush1.bf16.msra.mxu0 %v322
  %336 = vmatprep.subr.bf16.mxu0 0
  %337 = vmatpush1.bf16.msra.mxu0 %v321
  %338 = vmatprep.subr.bf16.mxu0 0
  %339 = vmatpush1.bf16.msra.mxu0 %v320
  %340 = vmatprep.subr.bf16.mxu0 0
  %341 = vmatpush1.bf16.msra.mxu0 %v319
  %342 = vmatprep.subr.bf16.mxu0 0
  %343 = vmatpush1.bf16.msra.mxu0 %v318
  %344 = vmatprep.subr.bf16.mxu0 0
  %345 = vmatpush1.bf16.msra.mxu0 %v317
  %346 = vmatprep.subr.bf16.mxu0 0
  %347 = vmatpush1.bf16.msra.mxu0 %v316
  %348 = vmatprep.subr.bf16.mxu0 0
  %349 = vmatpush2.bf16.msra.mxu0 0
  %350 = vmatprep.subr.bf16.mxu0 0
  %351 = vmatpush2.bf16.msra.mxu0 0
  %352 = vmatprep.subr.bf16.mxu0 0
  %353 = vmatpush2.bf16.msra.mxu0 0
  %354 = vmatprep.subr.bf16.mxu0 0
  %355 = vmatpush2.bf16.msra.mxu0 0
  %356 = vmatprep.subr.bf16.mxu0 0
  %357 = vmatpush2.bf16.msra.mxu0 0
  %358 = vmatprep.subr.bf16.mxu0 0
  %359 = vmatpush2.bf16.msra.mxu0 0
  %360 = vmatprep.subr.bf16.mxu0 0
  %361 = vmatpush2.bf16.msra.mxu0 0
  %362 = vmatprep.subr.bf16.mxu0 0
  %363 = vmatpush2.bf16.msra.mxu0 0
  %364 = vmatprep.mubr.bf16.mxu0 0
  %365 = vmatmul.mubr.bf16.gmra.mxu0 %v265
  %v366 = vpop.f32.mrf.mxu0
  %v367 = vadd.f32 0.0, %v366
  %v368 = vpop.f32.mrf.mxu0
  %v369 = vpop.f32.mrf.mxu0
  %v370 = vadd.f32 0.0, %v369
  %v371 = vpop.f32.mrf.mxu0
  %372 = vmatprep.mubr.bf16.mxu0 0
  %373 = vmatmul.mubr.bf16.gmra.mxu0 %v266
  %v374 = vpop.f32.mrf.mxu0
  %v375 = vadd.f32 0.0, %v374
  %v376 = vpop.f32.mrf.mxu0
  %v377 = vpop.f32.mrf.mxu0
  %v378 = vadd.f32 0.0, %v377
  %v379 = vpop.f32.mrf.mxu0
  %380 = vdwg.mxu0
  %v381 = vadd.f32 %v247, %v367
  %v382 = vadd.f32 %v250, %v370
  %v383 = vadd.f32 %v255, %v375
  %v384 = vadd.f32 %v258, %v378
  %v385 = vld [vmem:[%s0 + $0x3] sm:$0xff]
  %v386 = vld [vmem:[%s0 + $0xb] sm:$0xff]
  %v387 = vld [vmem:[%s0 + $0x23] sm:$0xff]
  %v388 = vld [vmem:[%s0 + $0x2b] sm:$0xff]
  %v389 = vpack.c.bf16 %v386, %v385
  %v390 = vpack.c.bf16 %v388, %v387
  %s391 = scalar_lea.vmem %s1, 640
  %v392 = vld [vmem:[%s391] sm:$0xf]
  %v393 = vld [vmem:[%s391 + $0x4] sm:$0xf]
  %v394 = vld [vmem:[%s391 + $0x8] sm:$0xf]
  %v395 = vld [vmem:[%s391 + $0xc] sm:$0xf]
  %v396 = vld [vmem:[%s391 + $0x10] sm:$0xf]
  %v397 = vld [vmem:[%s391 + $0x14] sm:$0xf]
  %v398 = vld [vmem:[%s391 + $0x18] sm:$0xf]
  %v399 = vld [vmem:[%s391 + $0x1c] sm:$0xf]
  %v400 = vld [vmem:[%s391 + $0x20] sm:$0xf]
  %v401 = vld [vmem:[%s391 + $0x24] sm:$0xf]
  %v402 = vld [vmem:[%s391 + $0x28] sm:$0xf]
  %v403 = vld [vmem:[%s391 + $0x2c] sm:$0xf]
  %v404 = vld [vmem:[%s391 + $0x30] sm:$0xf]
  %v405 = vld [vmem:[%s391 + $0x34] sm:$0xf]
  %v406 = vld [vmem:[%s391 + $0x38] sm:$0xf]
  %v407 = vld [vmem:[%s391 + $0x3c] sm:$0xf]
  %v424 = vunpack.c.l.b16 %v392
  %v425 = vunpack.c.l.b16 %v393
  %v426 = vunpack.c.l.b16 %v394
  %v427 = vunpack.c.l.b16 %v395
  %v428 = vunpack.c.l.b16 %v396
  %v429 = vunpack.c.l.b16 %v397
  %v430 = vunpack.c.l.b16 %v398
  %v431 = vunpack.c.l.b16 %v399
  %v432 = vunpack.c.l.b16 %v400
  %v433 = vunpack.c.l.b16 %v401
  %v434 = vunpack.c.l.b16 %v402
  %v435 = vunpack.c.l.b16 %v403
  %v436 = vunpack.c.l.b16 %v404
  %v437 = vunpack.c.l.b16 %v405
  %v438 = vunpack.c.l.b16 %v406
  %v439 = vunpack.c.l.b16 %v407
  %v440 = vpack.c.b16 %v425, %v424
  %v441 = vpack.c.b16 %v427, %v426
  %v442 = vpack.c.b16 %v429, %v428
  %v443 = vpack.c.b16 %v431, %v430
  %v444 = vpack.c.b16 %v433, %v432
  %v445 = vpack.c.b16 %v435, %v434
  %v446 = vpack.c.b16 %v437, %v436
  %v447 = vpack.c.b16 %v439, %v438
  %456 = vmatprep.subr.bf16.mxu0 0
  %457 = vmatpush1.bf16.msra.mxu0 %v447
  %458 = vmatprep.subr.bf16.mxu0 0
  %459 = vmatpush1.bf16.msra.mxu0 %v446
  %460 = vmatprep.subr.bf16.mxu0 0
  %461 = vmatpush1.bf16.msra.mxu0 %v445
  %462 = vmatprep.subr.bf16.mxu0 0
  %463 = vmatpush1.bf16.msra.mxu0 %v444
  %464 = vmatprep.subr.bf16.mxu0 0
  %465 = vmatpush1.bf16.msra.mxu0 %v443
  %466 = vmatprep.subr.bf16.mxu0 0
  %467 = vmatpush1.bf16.msra.mxu0 %v442
  %468 = vmatprep.subr.bf16.mxu0 0
  %469 = vmatpush1.bf16.msra.mxu0 %v441
  %470 = vmatprep.subr.bf16.mxu0 0
  %471 = vmatpush1.bf16.msra.mxu0 %v440
  %472 = vmatprep.subr.bf16.mxu0 0
  %473 = vmatpush2.bf16.msra.mxu0 0
  %474 = vmatprep.subr.bf16.mxu0 0
  %475 = vmatpush2.bf16.msra.mxu0 0
  %476 = vmatprep.subr.bf16.mxu0 0
  %477 = vmatpush2.bf16.msra.mxu0 0
  %478 = vmatprep.subr.bf16.mxu0 0
  %479 = vmatpush2.bf16.msra.mxu0 0
  %480 = vmatprep.subr.bf16.mxu0 0
  %481 = vmatpush2.bf16.msra.mxu0 0
  %482 = vmatprep.subr.bf16.mxu0 0
  %483 = vmatpush2.bf16.msra.mxu0 0
  %484 = vmatprep.subr.bf16.mxu0 0
  %485 = vmatpush2.bf16.msra.mxu0 0
  %486 = vmatprep.subr.bf16.mxu0 0
  %487 = vmatpush2.bf16.msra.mxu0 0
  %488 = vmatprep.mubr.bf16.mxu0 0
  %489 = vmatmul.mubr.bf16.gmra.mxu0 %v389
  %v490 = vpop.f32.mrf.mxu0
  %v491 = vadd.f32 0.0, %v490
  %v492 = vpop.f32.mrf.mxu0
  %v493 = vpop.f32.mrf.mxu0
  %v494 = vadd.f32 0.0, %v493
  %v495 = vpop.f32.mrf.mxu0
  %496 = vmatprep.mubr.bf16.mxu0 0
  %497 = vmatmul.mubr.bf16.gmra.mxu0 %v390
  %v498 = vpop.f32.mrf.mxu0
  %v499 = vadd.f32 0.0, %v498
  %v500 = vpop.f32.mrf.mxu0
  %v501 = vpop.f32.mrf.mxu0
  %v502 = vadd.f32 0.0, %v501
  %v503 = vpop.f32.mrf.mxu0
  %504 = vdwg.mxu0
  %v505 = vadd.f32 %v381, %v491
  %v506 = vadd.f32 %v382, %v494
  %v507 = vadd.f32 %v383, %v499
  %v508 = vadd.f32 %v384, %v502
  %v509 = vld [vmem:[%s0 + $0x4] sm:$0xff]
  %v510 = vld [vmem:[%s0 + $0xc] sm:$0xff]
  %v511 = vld [vmem:[%s0 + $0x24] sm:$0xff]
  %v512 = vld [vmem:[%s0 + $0x2c] sm:$0xff]
  %v513 = vpack.c.bf16 %v510, %v509
  %v514 = vpack.c.bf16 %v512, %v511
  %s515 = scalar_lea.vmem %s1, 832
  %v516 = vld [vmem:[%s515] sm:$0xf]
  %v517 = vld [vmem:[%s515 + $0x4] sm:$0xf]
  %v518 = vld [vmem:[%s515 + $0x8] sm:$0xf]
  %v519 = vld [vmem:[%s515 + $0xc] sm:$0xf]
  %v520 = vld [vmem:[%s515 + $0x10] sm:$0xf]
  %v521 = vld [vmem:[%s515 + $0x14] sm:$0xf]
  %v522 = vld [vmem:[%s515 + $0x18] sm:$0xf]
  %v523 = vld [vmem:[%s515 + $0x1c] sm:$0xf]
  %v524 = vld [vmem:[%s515 + $0x20] sm:$0xf]
  %v525 = vld [vmem:[%s515 + $0x24] sm:$0xf]
  %v526 = vld [vmem:[%s515 + $0x28] sm:$0xf]
  %v527 = vld [vmem:[%s515 + $0x2c] sm:$0xf]
  %v528 = vld [vmem:[%s515 + $0x30] sm:$0xf]
  %v529 = vld [vmem:[%s515 + $0x34] sm:$0xf]
  %v530 = vld [vmem:[%s515 + $0x38] sm:$0xf]
  %v531 = vld [vmem:[%s515 + $0x3c] sm:$0xf]
  %v548 = vunpack.c.l.b16 %v516
  %v549 = vunpack.c.l.b16 %v517
  %v550 = vunpack.c.l.b16 %v518
  %v551 = vunpack.c.l.b16 %v519
  %v552 = vunpack.c.l.b16 %v520
  %v553 = vunpack.c.l.b16 %v521
  %v554 = vunpack.c.l.b16 %v522
  %v555 = vunpack.c.l.b16 %v523
  %v556 = vunpack.c.l.b16 %v524
  %v557 = vunpack.c.l.b16 %v525
  %v558 = vunpack.c.l.b16 %v526
  %v559 = vunpack.c.l.b16 %v527
  %v560 = vunpack.c.l.b16 %v528
  %v561 = vunpack.c.l.b16 %v529
  %v562 = vunpack.c.l.b16 %v530
  %v563 = vunpack.c.l.b16 %v531
  %v564 = vpack.c.b16 %v549, %v548
  %v565 = vpack.c.b16 %v551, %v550
  %v566 = vpack.c.b16 %v553, %v552
  %v567 = vpack.c.b16 %v555, %v554
  %v568 = vpack.c.b16 %v557, %v556
  %v569 = vpack.c.b16 %v559, %v558
  %v570 = vpack.c.b16 %v561, %v560
  %v571 = vpack.c.b16 %v563, %v562
  %580 = vmatprep.subr.bf16.mxu0 0
  %581 = vmatpush1.bf16.msra.mxu0 %v571
  %582 = vmatprep.subr.bf16.mxu0 0
  %583 = vmatpush1.bf16.msra.mxu0 %v570
  %584 = vmatprep.subr.bf16.mxu0 0
  %585 = vmatpush1.bf16.msra.mxu0 %v569
  %586 = vmatprep.subr.bf16.mxu0 0
  %587 = vmatpush1.bf16.msra.mxu0 %v568
  %588 = vmatprep.subr.bf16.mxu0 0
  %589 = vmatpush1.bf16.msra.mxu0 %v567
  %590 = vmatprep.subr.bf16.mxu0 0
  %591 = vmatpush1.bf16.msra.mxu0 %v566
  %592 = vmatprep.subr.bf16.mxu0 0
  %593 = vmatpush1.bf16.msra.mxu0 %v565
  %594 = vmatprep.subr.bf16.mxu0 0
  %595 = vmatpush1.bf16.msra.mxu0 %v564
  %596 = vmatprep.subr.bf16.mxu0 0
  %597 = vmatpush2.bf16.msra.mxu0 0
  %598 = vmatprep.subr.bf16.mxu0 0
  %599 = vmatpush2.bf16.msra.mxu0 0
  %600 = vmatprep.subr.bf16.mxu0 0
  %601 = vmatpush2.bf16.msra.mxu0 0
  %602 = vmatprep.subr.bf16.mxu0 0
  %603 = vmatpush2.bf16.msra.mxu0 0
  %604 = vmatprep.subr.bf16.mxu0 0
  %605 = vmatpush2.bf16.msra.mxu0 0
  %606 = vmatprep.subr.bf16.mxu0 0
  %607 = vmatpush2.bf16.msra.mxu0 0
  %608 = vmatprep.subr.bf16.mxu0 0
  %609 = vmatpush2.bf16.msra.mxu0 0
  %610 = vmatprep.subr.bf16.mxu0 0
  %611 = vmatpush2.bf16.msra.mxu0 0
  %612 = vmatprep.mubr.bf16.mxu0 0
  %613 = vmatmul.mubr.bf16.gmra.mxu0 %v513
  %v614 = vpop.f32.mrf.mxu0
  %v615 = vadd.f32 0.0, %v614
  %v616 = vpop.f32.mrf.mxu0
  %v617 = vpop.f32.mrf.mxu0
  %v618 = vadd.f32 0.0, %v617
  %v619 = vpop.f32.mrf.mxu0
  %620 = vmatprep.mubr.bf16.mxu0 0
  %621 = vmatmul.mubr.bf16.gmra.mxu0 %v514
  %v622 = vpop.f32.mrf.mxu0
  %v623 = vadd.f32 0.0, %v622
  %v624 = vpop.f32.mrf.mxu0
  %v625 = vpop.f32.mrf.mxu0
  %v626 = vadd.f32 0.0, %v625
  %v627 = vpop.f32.mrf.mxu0
  %628 = vdwg.mxu0
  %v629 = vadd.f32 %v505, %v615
  %v630 = vadd.f32 %v506, %v618
  %v631 = vadd.f32 %v507, %v623
  %v632 = vadd.f32 %v508, %v626
  %v633 = vld [vmem:[%s0 + $0x5] sm:$0xff]
  %v634 = vld [vmem:[%s0 + $0xd] sm:$0xff]
  %v635 = vld [vmem:[%s0 + $0x25] sm:$0xff]
  %v636 = vld [vmem:[%s0 + $0x2d] sm:$0xff]
  %v637 = vpack.c.bf16 %v634, %v633
  %v638 = vpack.c.bf16 %v636, %v635
  %s639 = scalar_lea.vmem %s1, 1024
  %v640 = vld [vmem:[%s639] sm:$0xf]
  %v641 = vld [vmem:[%s639 + $0x4] sm:$0xf]
  %v642 = vld [vmem:[%s639 + $0x8] sm:$0xf]
  %v643 = vld [vmem:[%s639 + $0xc] sm:$0xf]
  %v644 = vld [vmem:[%s639 + $0x10] sm:$0xf]
  %v645 = vld [vmem:[%s639 + $0x14] sm:$0xf]
  %v646 = vld [vmem:[%s639 + $0x18] sm:$0xf]
  %v647 = vld [vmem:[%s639 + $0x1c] sm:$0xf]
  %v648 = vld [vmem:[%s639 + $0x20] sm:$0xf]
  %v649 = vld [vmem:[%s639 + $0x24] sm:$0xf]
  %v650 = vld [vmem:[%s639 + $0x28] sm:$0xf]
  %v651 = vld [vmem:[%s639 + $0x2c] sm:$0xf]
  %v652 = vld [vmem:[%s639 + $0x30] sm:$0xf]
  %v653 = vld [vmem:[%s639 + $0x34] sm:$0xf]
  %v654 = vld [vmem:[%s639 + $0x38] sm:$0xf]
  %v655 = vld [vmem:[%s639 + $0x3c] sm:$0xf]
  %v672 = vunpack.c.l.b16 %v640
  %v673 = vunpack.c.l.b16 %v641
  %v674 = vunpack.c.l.b16 %v642
  %v675 = vunpack.c.l.b16 %v643
  %v676 = vunpack.c.l.b16 %v644
  %v677 = vunpack.c.l.b16 %v645
  %v678 = vunpack.c.l.b16 %v646
  %v679 = vunpack.c.l.b16 %v647
  %v680 = vunpack.c.l.b16 %v648
  %v681 = vunpack.c.l.b16 %v649
  %v682 = vunpack.c.l.b16 %v650
  %v683 = vunpack.c.l.b16 %v651
  %v684 = vunpack.c.l.b16 %v652
  %v685 = vunpack.c.l.b16 %v653
  %v686 = vunpack.c.l.b16 %v654
  %v687 = vunpack.c.l.b16 %v655
  %v688 = vpack.c.b16 %v673, %v672
  %v689 = vpack.c.b16 %v675, %v674
  %v690 = vpack.c.b16 %v677, %v676
  %v691 = vpack.c.b16 %v679, %v678
  %v692 = vpack.c.b16 %v681, %v680
  %v693 = vpack.c.b16 %v683, %v682
  %v694 = vpack.c.b16 %v685, %v684
  %v695 = vpack.c.b16 %v687, %v686
  %704 = vmatprep.subr.bf16.mxu0 0
  %705 = vmatpush1.bf16.msra.mxu0 %v695
  %706 = vmatprep.subr.bf16.mxu0 0
  %707 = vmatpush1.bf16.msra.mxu0 %v694
  %708 = vmatprep.subr.bf16.mxu0 0
  %709 = vmatpush1.bf16.msra.mxu0 %v693
  %710 = vmatprep.subr.bf16.mxu0 0
  %711 = vmatpush1.bf16.msra.mxu0 %v692
  %712 = vmatprep.subr.bf16.mxu0 0
  %713 = vmatpush1.bf16.msra.mxu0 %v691
  %714 = vmatprep.subr.bf16.mxu0 0
  %715 = vmatpush1.bf16.msra.mxu0 %v690
  %716 = vmatprep.subr.bf16.mxu0 0
  %717 = vmatpush1.bf16.msra.mxu0 %v689
  %718 = vmatprep.subr.bf16.mxu0 0
  %719 = vmatpush1.bf16.msra.mxu0 %v688
  %720 = vmatprep.subr.bf16.mxu0 0
  %721 = vmatpush2.bf16.msra.mxu0 0
  %722 = vmatprep.subr.bf16.mxu0 0
  %723 = vmatpush2.bf16.msra.mxu0 0
  %724 = vmatprep.subr.bf16.mxu0 0
  %725 = vmatpush2.bf16.msra.mxu0 0
  %726 = vmatprep.subr.bf16.mxu0 0
  %727 = vmatpush2.bf16.msra.mxu0 0
  %728 = vmatprep.subr.bf16.mxu0 0
  %729 = vmatpush2.bf16.msra.mxu0 0
  %730 = vmatprep.subr.bf16.mxu0 0
  %731 = vmatpush2.bf16.msra.mxu0 0
  %732 = vmatprep.subr.bf16.mxu0 0
  %733 = vmatpush2.bf16.msra.mxu0 0
  %734 = vmatprep.subr.bf16.mxu0 0
  %735 = vmatpush2.bf16.msra.mxu0 0
  %736 = vmatprep.mubr.bf16.mxu0 0
  %737 = vmatmul.mubr.bf16.gmra.mxu0 %v637
  %v738 = vpop.f32.mrf.mxu0
  %v739 = vadd.f32 0.0, %v738
  %v740 = vpop.f32.mrf.mxu0
  %v741 = vpop.f32.mrf.mxu0
  %v742 = vadd.f32 0.0, %v741
  %v743 = vpop.f32.mrf.mxu0
  %744 = vmatprep.mubr.bf16.mxu0 0
  %745 = vmatmul.mubr.bf16.gmra.mxu0 %v638
  %v746 = vpop.f32.mrf.mxu0
  %v747 = vadd.f32 0.0, %v746
  %v748 = vpop.f32.mrf.mxu0
  %v749 = vpop.f32.mrf.mxu0
  %v750 = vadd.f32 0.0, %v749
  %v751 = vpop.f32.mrf.mxu0
  %752 = vdwg.mxu0
  %v753 = vadd.f32 %v629, %v739
  %v754 = vadd.f32 %v630, %v742
  %v755 = vadd.f32 %v631, %v747
  %v756 = vadd.f32 %v632, %v750
  %v757 = vld [vmem:[%s0 + $0x6] sm:$0xff]
  %v758 = vld [vmem:[%s0 + $0xe] sm:$0xff]
  %v759 = vld [vmem:[%s0 + $0x26] sm:$0xff]
  %v760 = vld [vmem:[%s0 + $0x2e] sm:$0xff]
  %v761 = vpack.c.bf16 %v758, %v757
  %v762 = vpack.c.bf16 %v760, %v759
  %s763 = scalar_lea.vmem %s1, 1216
  %v764 = vld [vmem:[%s763] sm:$0xf]
  %v765 = vld [vmem:[%s763 + $0x4] sm:$0xf]
  %v766 = vld [vmem:[%s763 + $0x8] sm:$0xf]
  %v767 = vld [vmem:[%s763 + $0xc] sm:$0xf]
  %v768 = vld [vmem:[%s763 + $0x10] sm:$0xf]
  %v769 = vld [vmem:[%s763 + $0x14] sm:$0xf]
  %v770 = vld [vmem:[%s763 + $0x18] sm:$0xf]
  %v771 = vld [vmem:[%s763 + $0x1c] sm:$0xf]
  %v772 = vld [vmem:[%s763 + $0x20] sm:$0xf]
  %v773 = vld [vmem:[%s763 + $0x24] sm:$0xf]
  %v774 = vld [vmem:[%s763 + $0x28] sm:$0xf]
  %v775 = vld [vmem:[%s763 + $0x2c] sm:$0xf]
  %v776 = vld [vmem:[%s763 + $0x30] sm:$0xf]
  %v777 = vld [vmem:[%s763 + $0x34] sm:$0xf]
  %v778 = vld [vmem:[%s763 + $0x38] sm:$0xf]
  %v779 = vld [vmem:[%s763 + $0x3c] sm:$0xf]
  %v796 = vunpack.c.l.b16 %v764
  %v797 = vunpack.c.l.b16 %v765
  %v798 = vunpack.c.l.b16 %v766
  %v799 = vunpack.c.l.b16 %v767
  %v800 = vunpack.c.l.b16 %v768
  %v801 = vunpack.c.l.b16 %v769
  %v802 = vunpack.c.l.b16 %v770
  %v803 = vunpack.c.l.b16 %v771
  %v804 = vunpack.c.l.b16 %v772
  %v805 = vunpack.c.l.b16 %v773
  %v806 = vunpack.c.l.b16 %v774
  %v807 = vunpack.c.l.b16 %v775
  %v808 = vunpack.c.l.b16 %v776
  %v809 = vunpack.c.l.b16 %v777
  %v810 = vunpack.c.l.b16 %v778
  %v811 = vunpack.c.l.b16 %v779
  %v812 = vpack.c.b16 %v797, %v796
  %v813 = vpack.c.b16 %v799, %v798
  %v814 = vpack.c.b16 %v801, %v800
  %v815 = vpack.c.b16 %v803, %v802
  %v816 = vpack.c.b16 %v805, %v804
  %v817 = vpack.c.b16 %v807, %v806
  %v818 = vpack.c.b16 %v809, %v808
  %v819 = vpack.c.b16 %v811, %v810
  %828 = vmatprep.subr.bf16.mxu0 0
  %829 = vmatpush1.bf16.msra.mxu0 %v819
  %830 = vmatprep.subr.bf16.mxu0 0
  %831 = vmatpush1.bf16.msra.mxu0 %v818
  %832 = vmatprep.subr.bf16.mxu0 0
  %833 = vmatpush1.bf16.msra.mxu0 %v817
  %834 = vmatprep.subr.bf16.mxu0 0
  %835 = vmatpush1.bf16.msra.mxu0 %v816
  %836 = vmatprep.subr.bf16.mxu0 0
  %837 = vmatpush1.bf16.msra.mxu0 %v815
  %838 = vmatprep.subr.bf16.mxu0 0
  %839 = vmatpush1.bf16.msra.mxu0 %v814
  %840 = vmatprep.subr.bf16.mxu0 0
  %841 = vmatpush1.bf16.msra.mxu0 %v813
  %842 = vmatprep.subr.bf16.mxu0 0
  %843 = vmatpush1.bf16.msra.mxu0 %v812
  %844 = vmatprep.subr.bf16.mxu0 0
  %845 = vmatpush2.bf16.msra.mxu0 0
  %846 = vmatprep.subr.bf16.mxu0 0
  %847 = vmatpush2.bf16.msra.mxu0 0
  %848 = vmatprep.subr.bf16.mxu0 0
  %849 = vmatpush2.bf16.msra.mxu0 0
  %850 = vmatprep.subr.bf16.mxu0 0
  %851 = vmatpush2.bf16.msra.mxu0 0
  %852 = vmatprep.subr.bf16.mxu0 0
  %853 = vmatpush2.bf16.msra.mxu0 0
  %854 = vmatprep.subr.bf16.mxu0 0
  %855 = vmatpush2.bf16.msra.mxu0 0
  %856 = vmatprep.subr.bf16.mxu0 0
  %857 = vmatpush2.bf16.msra.mxu0 0
  %858 = vmatprep.subr.bf16.mxu0 0
  %859 = vmatpush2.bf16.msra.mxu0 0
  %860 = vmatprep.mubr.bf16.mxu0 0
  %861 = vmatmul.mubr.bf16.gmra.mxu0 %v761
  %v862 = vpop.f32.mrf.mxu0
  %v863 = vadd.f32 0.0, %v862
  %v864 = vpop.f32.mrf.mxu0
  %v865 = vpop.f32.mrf.mxu0
  %v866 = vadd.f32 0.0, %v865
  %v867 = vpop.f32.mrf.mxu0
  %868 = vmatprep.mubr.bf16.mxu0 0
  %869 = vmatmul.mubr.bf16.gmra.mxu0 %v762
  %v870 = vpop.f32.mrf.mxu0
  %v871 = vadd.f32 0.0, %v870
  %v872 = vpop.f32.mrf.mxu0
  %v873 = vpop.f32.mrf.mxu0
  %v874 = vadd.f32 0.0, %v873
  %v875 = vpop.f32.mrf.mxu0
  %876 = vdwg.mxu0
  %v877 = vadd.f32 %v753, %v863
  %v878 = vadd.f32 %v754, %v866
  %v879 = vadd.f32 %v755, %v871
  %v880 = vadd.f32 %v756, %v874
  %v881 = vld [vmem:[%s0 + $0x7] sm:$0xff]
  %v882 = vld [vmem:[%s0 + $0xf] sm:$0xff]
  %v883 = vld [vmem:[%s0 + $0x27] sm:$0xff]
  %v884 = vld [vmem:[%s0 + $0x2f] sm:$0xff]
  %v885 = vpack.c.bf16 %v882, %v881
  %v886 = vpack.c.bf16 %v884, %v883
  %s887 = scalar_lea.vmem %s1, 1408
  %v888 = vld [vmem:[%s887] sm:$0xf]
  %v889 = vld [vmem:[%s887 + $0x4] sm:$0xf]
  %v890 = vld [vmem:[%s887 + $0x8] sm:$0xf]
  %v891 = vld [vmem:[%s887 + $0xc] sm:$0xf]
  %v892 = vld [vmem:[%s887 + $0x10] sm:$0xf]
  %v893 = vld [vmem:[%s887 + $0x14] sm:$0xf]
  %v894 = vld [vmem:[%s887 + $0x18] sm:$0xf]
  %v895 = vld [vmem:[%s887 + $0x1c] sm:$0xf]
  %v896 = vld [vmem:[%s887 + $0x20] sm:$0xf]
  %v897 = vld [vmem:[%s887 + $0x24] sm:$0xf]
  %v898 = vld [vmem:[%s887 + $0x28] sm:$0xf]
  %v899 = vld [vmem:[%s887 + $0x2c] sm:$0xf]
  %v900 = vld [vmem:[%s887 + $0x30] sm:$0xf]
  %v901 = vld [vmem:[%s887 + $0x34] sm:$0xf]
  %v902 = vld [vmem:[%s887 + $0x38] sm:$0xf]
  %v903 = vld [vmem:[%s887 + $0x3c] sm:$0xf]
  %v920 = vunpack.c.l.b16 %v888
  %v921 = vunpack.c.l.b16 %v889
  %v922 = vunpack.c.l.b16 %v890
  %v923 = vunpack.c.l.b16 %v891
  %v924 = vunpack.c.l.b16 %v892
  %v925 = vunpack.c.l.b16 %v893
  %v926 = vunpack.c.l.b16 %v894
  %v927 = vunpack.c.l.b16 %v895
  %v928 = vunpack.c.l.b16 %v896
  %v929 = vunpack.c.l.b16 %v897
  %v930 = vunpack.c.l.b16 %v898
  %v931 = vunpack.c.l.b16 %v899
  %v932 = vunpack.c.l.b16 %v900
  %v933 = vunpack.c.l.b16 %v901
  %v934 = vunpack.c.l.b16 %v902
  %v935 = vunpack.c.l.b16 %v903
  %v936 = vpack.c.b16 %v921, %v920
  %v937 = vpack.c.b16 %v923, %v922
  %v938 = vpack.c.b16 %v925, %v924
  %v939 = vpack.c.b16 %v927, %v926
  %v940 = vpack.c.b16 %v929, %v928
  %v941 = vpack.c.b16 %v931, %v930
  %v942 = vpack.c.b16 %v933, %v932
  %v943 = vpack.c.b16 %v935, %v934
  %952 = vmatprep.subr.bf16.mxu0 0
  %953 = vmatpush1.bf16.msra.mxu0 %v943
  %954 = vmatprep.subr.bf16.mxu0 0
  %955 = vmatpush1.bf16.msra.mxu0 %v942
  %956 = vmatprep.subr.bf16.mxu0 0
  %957 = vmatpush1.bf16.msra.mxu0 %v941
  %958 = vmatprep.subr.bf16.mxu0 0
  %959 = vmatpush1.bf16.msra.mxu0 %v940
  %960 = vmatprep.subr.bf16.mxu0 0
  %961 = vmatpush1.bf16.msra.mxu0 %v939
  %962 = vmatprep.subr.bf16.mxu0 0
  %963 = vmatpush1.bf16.msra.mxu0 %v938
  %964 = vmatprep.subr.bf16.mxu0 0
  %965 = vmatpush1.bf16.msra.mxu0 %v937
  %966 = vmatprep.subr.bf16.mxu0 0
  %967 = vmatpush1.bf16.msra.mxu0 %v936
  %968 = vmatprep.subr.bf16.mxu0 0
  %969 = vmatpush2.bf16.msra.mxu0 0
  %970 = vmatprep.subr.bf16.mxu0 0
  %971 = vmatpush2.bf16.msra.mxu0 0
  %972 = vmatprep.subr.bf16.mxu0 0
  %973 = vmatpush2.bf16.msra.mxu0 0
  %974 = vmatprep.subr.bf16.mxu0 0
  %975 = vmatpush2.bf16.msra.mxu0 0
  %976 = vmatprep.subr.bf16.mxu0 0
  %977 = vmatpush2.bf16.msra.mxu0 0
  %978 = vmatprep.subr.bf16.mxu0 0
  %979 = vmatpush2.bf16.msra.mxu0 0
  %980 = vmatprep.subr.bf16.mxu0 0
  %981 = vmatpush2.bf16.msra.mxu0 0
  %982 = vmatprep.subr.bf16.mxu0 0
  %983 = vmatpush2.bf16.msra.mxu0 0
  %984 = vmatprep.mubr.bf16.mxu0 0
  %985 = vmatmul.mubr.bf16.gmra.mxu0 %v885
  %v986 = vpop.f32.mrf.mxu0
  %v987 = vadd.f32 0.0, %v986
  %v988 = vpop.f32.mrf.mxu0
  %v989 = vpop.f32.mrf.mxu0
  %v990 = vadd.f32 0.0, %v989
  %v991 = vpop.f32.mrf.mxu0
  %992 = vmatprep.mubr.bf16.mxu0 0
  %993 = vmatmul.mubr.bf16.gmra.mxu0 %v886
  %v994 = vpop.f32.mrf.mxu0
  %v995 = vadd.f32 0.0, %v994
  %v996 = vpop.f32.mrf.mxu0
  %v997 = vpop.f32.mrf.mxu0
  %v998 = vadd.f32 0.0, %v997
  %v999 = vpop.f32.mrf.mxu0
  %1000 = vdwg.mxu0
  %v1001 = vadd.f32 %v877, %v987
  %v1002 = vadd.f32 %v878, %v990
  %v1003 = vadd.f32 %v879, %v995
  %v1004 = vadd.f32 %v880, %v998
  %v1005 = vld [vmem:[%s0 + $0x8] sm:$0xff]
  %v1006 = vld [vmem:[%s0 + $0x10] sm:$0xff]
  %v1007 = vld [vmem:[%s0 + $0x28] sm:$0xff]
  %v1008 = vld [vmem:[%s0 + $0x30] sm:$0xff]
  %v1009 = vpack.c.bf16 %v1006, %v1005
  %v1010 = vpack.c.bf16 %v1008, %v1007
  %s1011 = scalar_lea.vmem %s1, 1600
  %v1012 = vld [vmem:[%s1011] sm:$0xf]
  %v1013 = vld [vmem:[%s1011 + $0x4] sm:$0xf]
  %v1014 = vld [vmem:[%s1011 + $0x8] sm:$0xf]
  %v1015 = vld [vmem:[%s1011 + $0xc] sm:$0xf]
  %v1016 = vld [vmem:[%s1011 + $0x10] sm:$0xf]
  %v1017 = vld [vmem:[%s1011 + $0x14] sm:$0xf]
  %v1018 = vld [vmem:[%s1011 + $0x18] sm:$0xf]
  %v1019 = vld [vmem:[%s1011 + $0x1c] sm:$0xf]
  %v1020 = vld [vmem:[%s1011 + $0x20] sm:$0xf]
  %v1021 = vld [vmem:[%s1011 + $0x24] sm:$0xf]
  %v1022 = vld [vmem:[%s1011 + $0x28] sm:$0xf]
  %v1023 = vld [vmem:[%s1011 + $0x2c] sm:$0xf]
  %v1024 = vld [vmem:[%s1011 + $0x30] sm:$0xf]
  %v1025 = vld [vmem:[%s1011 + $0x34] sm:$0xf]
  %v1026 = vld [vmem:[%s1011 + $0x38] sm:$0xf]
  %v1027 = vld [vmem:[%s1011 + $0x3c] sm:$0xf]
  %v1044 = vunpack.c.l.b16 %v1012
  %v1045 = vunpack.c.l.b16 %v1013
  %v1046 = vunpack.c.l.b16 %v1014
  %v1047 = vunpack.c.l.b16 %v1015
  %v1048 = vunpack.c.l.b16 %v1016
  %v1049 = vunpack.c.l.b16 %v1017
  %v1050 = vunpack.c.l.b16 %v1018
  %v1051 = vunpack.c.l.b16 %v1019
  %v1052 = vunpack.c.l.b16 %v1020
  %v1053 = vunpack.c.l.b16 %v1021
  %v1054 = vunpack.c.l.b16 %v1022
  %v1055 = vunpack.c.l.b16 %v1023
  %v1056 = vunpack.c.l.b16 %v1024
  %v1057 = vunpack.c.l.b16 %v1025
  %v1058 = vunpack.c.l.b16 %v1026
  %v1059 = vunpack.c.l.b16 %v1027
  %v1060 = vpack.c.b16 %v1045, %v1044
  %v1061 = vpack.c.b16 %v1047, %v1046
  %v1062 = vpack.c.b16 %v1049, %v1048
  %v1063 = vpack.c.b16 %v1051, %v1050
  %v1064 = vpack.c.b16 %v1053, %v1052
  %v1065 = vpack.c.b16 %v1055, %v1054
  %v1066 = vpack.c.b16 %v1057, %v1056
  %v1067 = vpack.c.b16 %v1059, %v1058
  %1076 = vmatprep.subr.bf16.mxu0 0
  %1077 = vmatpush1.bf16.msra.mxu0 %v1067
  %1078 = vmatprep.subr.bf16.mxu0 0
  %1079 = vmatpush1.bf16.msra.mxu0 %v1066
  %1080 = vmatprep.subr.bf16.mxu0 0
  %1081 = vmatpush1.bf16.msra.mxu0 %v1065
  %1082 = vmatprep.subr.bf16.mxu0 0
  %1083 = vmatpush1.bf16.msra.mxu0 %v1064
  %1084 = vmatprep.subr.bf16.mxu0 0
  %1085 = vmatpush1.bf16.msra.mxu0 %v1063
  %1086 = vmatprep.subr.bf16.mxu0 0
  %1087 = vmatpush1.bf16.msra.mxu0 %v1062
  %1088 = vmatprep.subr.bf16.mxu0 0
  %1089 = vmatpush1.bf16.msra.mxu0 %v1061
  %1090 = vmatprep.subr.bf16.mxu0 0
  %1091 = vmatpush1.bf16.msra.mxu0 %v1060
  %1092 = vmatprep.subr.bf16.mxu0 0
  %1093 = vmatpush2.bf16.msra.mxu0 0
  %1094 = vmatprep.subr.bf16.mxu0 0
  %1095 = vmatpush2.bf16.msra.mxu0 0
  %1096 = vmatprep.subr.bf16.mxu0 0
  %1097 = vmatpush2.bf16.msra.mxu0 0
  %1098 = vmatprep.subr.bf16.mxu0 0
  %1099 = vmatpush2.bf16.msra.mxu0 0
  %1100 = vmatprep.subr.bf16.mxu0 0
  %1101 = vmatpush2.bf16.msra.mxu0 0
  %1102 = vmatprep.subr.bf16.mxu0 0
  %1103 = vmatpush2.bf16.msra.mxu0 0
  %1104 = vmatprep.subr.bf16.mxu0 0
  %1105 = vmatpush2.bf16.msra.mxu0 0
  %1106 = vmatprep.subr.bf16.mxu0 0
  %1107 = vmatpush2.bf16.msra.mxu0 0
  %1108 = vmatprep.mubr.bf16.mxu0 0
  %1109 = vmatmul.mubr.bf16.gmra.mxu0 %v1009
  %v1110 = vpop.f32.mrf.mxu0
  %v1111 = vadd.f32 0.0, %v1110
  %v1112 = vpop.f32.mrf.mxu0
  %v1113 = vpop.f32.mrf.mxu0
  %v1114 = vadd.f32 0.0, %v1113
  %v1115 = vpop.f32.mrf.mxu0
  %1116 = vmatprep.mubr.bf16.mxu0 0
  %1117 = vmatmul.mubr.bf16.gmra.mxu0 %v1010
  %v1118 = vpop.f32.mrf.mxu0
  %v1119 = vadd.f32 0.0, %v1118
  %v1120 = vpop.f32.mrf.mxu0
  %v1121 = vpop.f32.mrf.mxu0
  %v1122 = vadd.f32 0.0, %v1121
  %v1123 = vpop.f32.mrf.mxu0
  %1124 = vdwg.mxu0
  %v1125 = vadd.f32 %v1001, %v1111
  %v1126 = vadd.f32 %v1002, %v1114
  %v1127 = vadd.f32 %v1003, %v1119
  %v1128 = vadd.f32 %v1004, %v1122
  %v1129 = vld [vmem:[%s0 + $0x9] sm:$0xff]
  %v1130 = vld [vmem:[%s0 + $0x11] sm:$0xff]
  %v1131 = vld [vmem:[%s0 + $0x29] sm:$0xff]
  %v1132 = vld [vmem:[%s0 + $0x31] sm:$0xff]
  %v1133 = vpack.c.bf16 %v1130, %v1129
  %v1134 = vpack.c.bf16 %v1132, %v1131
  %s1135 = scalar_lea.vmem %s1, 1792
  %v1136 = vld [vmem:[%s1135] sm:$0xf]
  %v1137 = vld [vmem:[%s1135 + $0x4] sm:$0xf]
  %v1138 = vld [vmem:[%s1135 + $0x8] sm:$0xf]
  %v1139 = vld [vmem:[%s1135 + $0xc] sm:$0xf]
  %v1140 = vld [vmem:[%s1135 + $0x10] sm:$0xf]
  %v1141 = vld [vmem:[%s1135 + $0x14] sm:$0xf]
  %v1142 = vld [vmem:[%s1135 + $0x18] sm:$0xf]
  %v1143 = vld [vmem:[%s1135 + $0x1c] sm:$0xf]
  %v1144 = vld [vmem:[%s1135 + $0x20] sm:$0xf]
  %v1145 = vld [vmem:[%s1135 + $0x24] sm:$0xf]
  %v1146 = vld [vmem:[%s1135 + $0x28] sm:$0xf]
  %v1147 = vld [vmem:[%s1135 + $0x2c] sm:$0xf]
  %v1148 = vld [vmem:[%s1135 + $0x30] sm:$0xf]
  %v1149 = vld [vmem:[%s1135 + $0x34] sm:$0xf]
  %v1150 = vld [vmem:[%s1135 + $0x38] sm:$0xf]
  %v1151 = vld [vmem:[%s1135 + $0x3c] sm:$0xf]
  %v1168 = vunpack.c.l.b16 %v1136
  %v1169 = vunpack.c.l.b16 %v1137
  %v1170 = vunpack.c.l.b16 %v1138
  %v1171 = vunpack.c.l.b16 %v1139
  %v1172 = vunpack.c.l.b16 %v1140
  %v1173 = vunpack.c.l.b16 %v1141
  %v1174 = vunpack.c.l.b16 %v1142
  %v1175 = vunpack.c.l.b16 %v1143
  %v1176 = vunpack.c.l.b16 %v1144
  %v1177 = vunpack.c.l.b16 %v1145
  %v1178 = vunpack.c.l.b16 %v1146
  %v1179 = vunpack.c.l.b16 %v1147
  %v1180 = vunpack.c.l.b16 %v1148
  %v1181 = vunpack.c.l.b16 %v1149
  %v1182 = vunpack.c.l.b16 %v1150
  %v1183 = vunpack.c.l.b16 %v1151
  %v1184 = vpack.c.b16 %v1169, %v1168
  %v1185 = vpack.c.b16 %v1171, %v1170
  %v1186 = vpack.c.b16 %v1173, %v1172
  %v1187 = vpack.c.b16 %v1175, %v1174
  %v1188 = vpack.c.b16 %v1177, %v1176
  %v1189 = vpack.c.b16 %v1179, %v1178
  %v1190 = vpack.c.b16 %v1181, %v1180
  %v1191 = vpack.c.b16 %v1183, %v1182
  %1200 = vmatprep.subr.bf16.mxu0 0
  %1201 = vmatpush1.bf16.msra.mxu0 %v1191
  %1202 = vmatprep.subr.bf16.mxu0 0
  %1203 = vmatpush1.bf16.msra.mxu0 %v1190
  %1204 = vmatprep.subr.bf16.mxu0 0
  %1205 = vmatpush1.bf16.msra.mxu0 %v1189
  %1206 = vmatprep.subr.bf16.mxu0 0
  %1207 = vmatpush1.bf16.msra.mxu0 %v1188
  %1208 = vmatprep.subr.bf16.mxu0 0
  %1209 = vmatpush1.bf16.msra.mxu0 %v1187
  %1210 = vmatprep.subr.bf16.mxu0 0
  %1211 = vmatpush1.bf16.msra.mxu0 %v1186
  %1212 = vmatprep.subr.bf16.mxu0 0
  %1213 = vmatpush1.bf16.msra.mxu0 %v1185
  %1214 = vmatprep.subr.bf16.mxu0 0
  %1215 = vmatpush1.bf16.msra.mxu0 %v1184
  %1216 = vmatprep.subr.bf16.mxu0 0
  %1217 = vmatpush2.bf16.msra.mxu0 0
  %1218 = vmatprep.subr.bf16.mxu0 0
  %1219 = vmatpush2.bf16.msra.mxu0 0
  %1220 = vmatprep.subr.bf16.mxu0 0
  %1221 = vmatpush2.bf16.msra.mxu0 0
  %1222 = vmatprep.subr.bf16.mxu0 0
  %1223 = vmatpush2.bf16.msra.mxu0 0
  %1224 = vmatprep.subr.bf16.mxu0 0
  %1225 = vmatpush2.bf16.msra.mxu0 0
  %1226 = vmatprep.subr.bf16.mxu0 0
  %1227 = vmatpush2.bf16.msra.mxu0 0
  %1228 = vmatprep.subr.bf16.mxu0 0
  %1229 = vmatpush2.bf16.msra.mxu0 0
  %1230 = vmatprep.subr.bf16.mxu0 0
  %1231 = vmatpush2.bf16.msra.mxu0 0
  %1232 = vmatprep.mubr.bf16.mxu0 0
  %1233 = vmatmul.mubr.bf16.gmra.mxu0 %v1133
  %v1234 = vpop.f32.mrf.mxu0
  %v1235 = vadd.f32 0.0, %v1234
  %v1236 = vpop.f32.mrf.mxu0
  %v1237 = vpop.f32.mrf.mxu0
  %v1238 = vadd.f32 0.0, %v1237
  %v1239 = vpop.f32.mrf.mxu0
  %1240 = vmatprep.mubr.bf16.mxu0 0
  %1241 = vmatmul.mubr.bf16.gmra.mxu0 %v1134
  %v1242 = vpop.f32.mrf.mxu0
  %v1243 = vadd.f32 0.0, %v1242
  %v1244 = vpop.f32.mrf.mxu0
  %v1245 = vpop.f32.mrf.mxu0
  %v1246 = vadd.f32 0.0, %v1245
  %v1247 = vpop.f32.mrf.mxu0
  %1248 = vdwg.mxu0
  %v1249 = vadd.f32 %v1125, %v1235
  %v1250 = vadd.f32 %v1126, %v1238
  %v1251 = vadd.f32 %v1127, %v1243
  %v1252 = vadd.f32 %v1128, %v1246
  %v1253 = vld [vmem:[%s0 + $0xa] sm:$0xff]
  %v1254 = vld [vmem:[%s0 + $0x12] sm:$0xff]
  %v1255 = vld [vmem:[%s0 + $0x2a] sm:$0xff]
  %v1256 = vld [vmem:[%s0 + $0x32] sm:$0xff]
  %v1257 = vpack.c.bf16 %v1254, %v1253
  %v1258 = vpack.c.bf16 %v1256, %v1255
  %s1259 = scalar_lea.vmem %s1, 1984
  %v1260 = vld [vmem:[%s1259] sm:$0xf]
  %v1261 = vld [vmem:[%s1259 + $0x4] sm:$0xf]
  %v1262 = vld [vmem:[%s1259 + $0x8] sm:$0xf]
  %v1263 = vld [vmem:[%s1259 + $0xc] sm:$0xf]
  %v1264 = vld [vmem:[%s1259 + $0x10] sm:$0xf]
  %v1265 = vld [vmem:[%s1259 + $0x14] sm:$0xf]
  %v1266 = vld [vmem:[%s1259 + $0x18] sm:$0xf]
  %v1267 = vld [vmem:[%s1259 + $0x1c] sm:$0xf]
  %v1268 = vld [vmem:[%s1259 + $0x20] sm:$0xf]
  %v1269 = vld [vmem:[%s1259 + $0x24] sm:$0xf]
  %v1270 = vld [vmem:[%s1259 + $0x28] sm:$0xf]
  %v1271 = vld [vmem:[%s1259 + $0x2c] sm:$0xf]
  %v1272 = vld [vmem:[%s1259 + $0x30] sm:$0xf]
  %v1273 = vld [vmem:[%s1259 + $0x34] sm:$0xf]
  %v1274 = vld [vmem:[%s1259 + $0x38] sm:$0xf]
  %v1275 = vld [vmem:[%s1259 + $0x3c] sm:$0xf]
  %v1292 = vunpack.c.l.b16 %v1260
  %v1293 = vunpack.c.l.b16 %v1261
  %v1294 = vunpack.c.l.b16 %v1262
  %v1295 = vunpack.c.l.b16 %v1263
  %v1296 = vunpack.c.l.b16 %v1264
  %v1297 = vunpack.c.l.b16 %v1265
  %v1298 = vunpack.c.l.b16 %v1266
  %v1299 = vunpack.c.l.b16 %v1267
  %v1300 = vunpack.c.l.b16 %v1268
  %v1301 = vunpack.c.l.b16 %v1269
  %v1302 = vunpack.c.l.b16 %v1270
  %v1303 = vunpack.c.l.b16 %v1271
  %v1304 = vunpack.c.l.b16 %v1272
  %v1305 = vunpack.c.l.b16 %v1273
  %v1306 = vunpack.c.l.b16 %v1274
  %v1307 = vunpack.c.l.b16 %v1275
  %v1308 = vpack.c.b16 %v1293, %v1292
  %v1309 = vpack.c.b16 %v1295, %v1294
  %v1310 = vpack.c.b16 %v1297, %v1296
  %v1311 = vpack.c.b16 %v1299, %v1298
  %v1312 = vpack.c.b16 %v1301, %v1300
  %v1313 = vpack.c.b16 %v1303, %v1302
  %v1314 = vpack.c.b16 %v1305, %v1304
  %v1315 = vpack.c.b16 %v1307, %v1306
  %1324 = vmatprep.subr.bf16.mxu0 0
  %1325 = vmatpush1.bf16.msra.mxu0 %v1315
  %1326 = vmatprep.subr.bf16.mxu0 0
  %1327 = vmatpush1.bf16.msra.mxu0 %v1314
  %1328 = vmatprep.subr.bf16.mxu0 0
  %1329 = vmatpush1.bf16.msra.mxu0 %v1313
  %1330 = vmatprep.subr.bf16.mxu0 0
  %1331 = vmatpush1.bf16.msra.mxu0 %v1312
  %1332 = vmatprep.subr.bf16.mxu0 0
  %1333 = vmatpush1.bf16.msra.mxu0 %v1311
  %1334 = vmatprep.subr.bf16.mxu0 0
  %1335 = vmatpush1.bf16.msra.mxu0 %v1310
  %1336 = vmatprep.subr.bf16.mxu0 0
  %1337 = vmatpush1.bf16.msra.mxu0 %v1309
  %1338 = vmatprep.subr.bf16.mxu0 0
  %1339 = vmatpush1.bf16.msra.mxu0 %v1308
  %1340 = vmatprep.subr.bf16.mxu0 0
  %1341 = vmatpush2.bf16.msra.mxu0 0
  %1342 = vmatprep.subr.bf16.mxu0 0
  %1343 = vmatpush2.bf16.msra.mxu0 0
  %1344 = vmatprep.subr.bf16.mxu0 0
  %1345 = vmatpush2.bf16.msra.mxu0 0
  %1346 = vmatprep.subr.bf16.mxu0 0
  %1347 = vmatpush2.bf16.msra.mxu0 0
  %1348 = vmatprep.subr.bf16.mxu0 0
  %1349 = vmatpush2.bf16.msra.mxu0 0
  %1350 = vmatprep.subr.bf16.mxu0 0
  %1351 = vmatpush2.bf16.msra.mxu0 0
  %1352 = vmatprep.subr.bf16.mxu0 0
  %1353 = vmatpush2.bf16.msra.mxu0 0
  %1354 = vmatprep.subr.bf16.mxu0 0
  %1355 = vmatpush2.bf16.msra.mxu0 0
  %1356 = vmatprep.mubr.bf16.mxu0 0
  %1357 = vmatmul.mubr.bf16.gmra.mxu0 %v1257
  %v1358 = vpop.f32.mrf.mxu0
  %v1359 = vadd.f32 0.0, %v1358
  %v1360 = vpop.f32.mrf.mxu0
  %v1361 = vpop.f32.mrf.mxu0
  %v1362 = vadd.f32 0.0, %v1361
  %v1363 = vpop.f32.mrf.mxu0
  %1364 = vmatprep.mubr.bf16.mxu0 0
  %1365 = vmatmul.mubr.bf16.gmra.mxu0 %v1258
  %v1366 = vpop.f32.mrf.mxu0
  %v1367 = vadd.f32 0.0, %v1366
  %v1368 = vpop.f32.mrf.mxu0
  %v1369 = vpop.f32.mrf.mxu0
  %v1370 = vadd.f32 0.0, %v1369
  %v1371 = vpop.f32.mrf.mxu0
  %1372 = vdwg.mxu0
  %v1373 = vadd.f32 %v1249, %v1359
  %v1374 = vadd.f32 %v1250, %v1362
  %v1375 = vadd.f32 %v1251, %v1367
  %v1376 = vadd.f32 %v1252, %v1370
  %v1377 = vld [vmem:[%s0 + $0xb] sm:$0xff]
  %v1378 = vld [vmem:[%s0 + $0x13] sm:$0xff]
  %v1379 = vld [vmem:[%s0 + $0x2b] sm:$0xff]
  %v1380 = vld [vmem:[%s0 + $0x33] sm:$0xff]
  %v1381 = vpack.c.bf16 %v1378, %v1377
  %v1382 = vpack.c.bf16 %v1380, %v1379
  %s1383 = scalar_lea.vmem %s1, 2176
  %v1384 = vld [vmem:[%s1383] sm:$0xf]
  %v1385 = vld [vmem:[%s1383 + $0x4] sm:$0xf]
  %v1386 = vld [vmem:[%s1383 + $0x8] sm:$0xf]
  %v1387 = vld [vmem:[%s1383 + $0xc] sm:$0xf]
  %v1388 = vld [vmem:[%s1383 + $0x10] sm:$0xf]
  %v1389 = vld [vmem:[%s1383 + $0x14] sm:$0xf]
  %v1390 = vld [vmem:[%s1383 + $0x18] sm:$0xf]
  %v1391 = vld [vmem:[%s1383 + $0x1c] sm:$0xf]
  %v1392 = vld [vmem:[%s1383 + $0x20] sm:$0xf]
  %v1393 = vld [vmem:[%s1383 + $0x24] sm:$0xf]
  %v1394 = vld [vmem:[%s1383 + $0x28] sm:$0xf]
  %v1395 = vld [vmem:[%s1383 + $0x2c] sm:$0xf]
  %v1396 = vld [vmem:[%s1383 + $0x30] sm:$0xf]
  %v1397 = vld [vmem:[%s1383 + $0x34] sm:$0xf]
  %v1398 = vld [vmem:[%s1383 + $0x38] sm:$0xf]
  %v1399 = vld [vmem:[%s1383 + $0x3c] sm:$0xf]
  %v1416 = vunpack.c.l.b16 %v1384
  %v1417 = vunpack.c.l.b16 %v1385
  %v1418 = vunpack.c.l.b16 %v1386
  %v1419 = vunpack.c.l.b16 %v1387
  %v1420 = vunpack.c.l.b16 %v1388
  %v1421 = vunpack.c.l.b16 %v1389
  %v1422 = vunpack.c.l.b16 %v1390
  %v1423 = vunpack.c.l.b16 %v1391
  %v1424 = vunpack.c.l.b16 %v1392
  %v1425 = vunpack.c.l.b16 %v1393
  %v1426 = vunpack.c.l.b16 %v1394
  %v1427 = vunpack.c.l.b16 %v1395
  %v1428 = vunpack.c.l.b16 %v1396
  %v1429 = vunpack.c.l.b16 %v1397
  %v1430 = vunpack.c.l.b16 %v1398
  %v1431 = vunpack.c.l.b16 %v1399
  %v1432 = vpack.c.b16 %v1417, %v1416
  %v1433 = vpack.c.b16 %v1419, %v1418
  %v1434 = vpack.c.b16 %v1421, %v1420
  %v1435 = vpack.c.b16 %v1423, %v1422
  %v1436 = vpack.c.b16 %v1425, %v1424
  %v1437 = vpack.c.b16 %v1427, %v1426
  %v1438 = vpack.c.b16 %v1429, %v1428
  %v1439 = vpack.c.b16 %v1431, %v1430
  %1448 = vmatprep.subr.bf16.mxu0 0
  %1449 = vmatpush1.bf16.msra.mxu0 %v1439
  %1450 = vmatprep.subr.bf16.mxu0 0
  %1451 = vmatpush1.bf16.msra.mxu0 %v1438
  %1452 = vmatprep.subr.bf16.mxu0 0
  %1453 = vmatpush1.bf16.msra.mxu0 %v1437
  %1454 = vmatprep.subr.bf16.mxu0 0
  %1455 = vmatpush1.bf16.msra.mxu0 %v1436
  %1456 = vmatprep.subr.bf16.mxu0 0
  %1457 = vmatpush1.bf16.msra.mxu0 %v1435
  %1458 = vmatprep.subr.bf16.mxu0 0
  %1459 = vmatpush1.bf16.msra.mxu0 %v1434
  %1460 = vmatprep.subr.bf16.mxu0 0
  %1461 = vmatpush1.bf16.msra.mxu0 %v1433
  %1462 = vmatprep.subr.bf16.mxu0 0
  %1463 = vmatpush1.bf16.msra.mxu0 %v1432
  %1464 = vmatprep.subr.bf16.mxu0 0
  %1465 = vmatpush2.bf16.msra.mxu0 0
  %1466 = vmatprep.subr.bf16.mxu0 0
  %1467 = vmatpush2.bf16.msra.mxu0 0
  %1468 = vmatprep.subr.bf16.mxu0 0
  %1469 = vmatpush2.bf16.msra.mxu0 0
  %1470 = vmatprep.subr.bf16.mxu0 0
  %1471 = vmatpush2.bf16.msra.mxu0 0
  %1472 = vmatprep.subr.bf16.mxu0 0
  %1473 = vmatpush2.bf16.msra.mxu0 0
  %1474 = vmatprep.subr.bf16.mxu0 0
  %1475 = vmatpush2.bf16.msra.mxu0 0
  %1476 = vmatprep.subr.bf16.mxu0 0
  %1477 = vmatpush2.bf16.msra.mxu0 0
  %1478 = vmatprep.subr.bf16.mxu0 0
  %1479 = vmatpush2.bf16.msra.mxu0 0
  %1480 = vmatprep.mubr.bf16.mxu0 0
  %1481 = vmatmul.mubr.bf16.gmra.mxu0 %v1381
  %v1482 = vpop.f32.mrf.mxu0
  %v1483 = vadd.f32 0.0, %v1482
  %v1484 = vpop.f32.mrf.mxu0
  %v1485 = vpop.f32.mrf.mxu0
  %v1486 = vadd.f32 0.0, %v1485
  %v1487 = vpop.f32.mrf.mxu0
  %1488 = vmatprep.mubr.bf16.mxu0 0
  %1489 = vmatmul.mubr.bf16.gmra.mxu0 %v1382
  %v1490 = vpop.f32.mrf.mxu0
  %v1491 = vadd.f32 0.0, %v1490
  %v1492 = vpop.f32.mrf.mxu0
  %v1493 = vpop.f32.mrf.mxu0
  %v1494 = vadd.f32 0.0, %v1493
  %v1495 = vpop.f32.mrf.mxu0
  %1496 = vdwg.mxu0
  %v1497 = vadd.f32 %v1373, %v1483
  %v1498 = vadd.f32 %v1374, %v1486
  %v1499 = vadd.f32 %v1375, %v1491
  %v1500 = vadd.f32 %v1376, %v1494
  %v1501 = vld [vmem:[%s0 + $0xc] sm:$0xff]
  %v1502 = vld [vmem:[%s0 + $0x14] sm:$0xff]
  %v1503 = vld [vmem:[%s0 + $0x2c] sm:$0xff]
  %v1504 = vld [vmem:[%s0 + $0x34] sm:$0xff]
  %v1505 = vpack.c.bf16 %v1502, %v1501
  %v1506 = vpack.c.bf16 %v1504, %v1503
  %s1507 = scalar_lea.vmem %s1, 2368
  %v1508 = vld [vmem:[%s1507] sm:$0xf]
  %v1509 = vld [vmem:[%s1507 + $0x4] sm:$0xf]
  %v1510 = vld [vmem:[%s1507 + $0x8] sm:$0xf]
  %v1511 = vld [vmem:[%s1507 + $0xc] sm:$0xf]
  %v1512 = vld [vmem:[%s1507 + $0x10] sm:$0xf]
  %v1513 = vld [vmem:[%s1507 + $0x14] sm:$0xf]
  %v1514 = vld [vmem:[%s1507 + $0x18] sm:$0xf]
  %v1515 = vld [vmem:[%s1507 + $0x1c] sm:$0xf]
  %v1516 = vld [vmem:[%s1507 + $0x20] sm:$0xf]
  %v1517 = vld [vmem:[%s1507 + $0x24] sm:$0xf]
  %v1518 = vld [vmem:[%s1507 + $0x28] sm:$0xf]
  %v1519 = vld [vmem:[%s1507 + $0x2c] sm:$0xf]
  %v1520 = vld [vmem:[%s1507 + $0x30] sm:$0xf]
  %v1521 = vld [vmem:[%s1507 + $0x34] sm:$0xf]
  %v1522 = vld [vmem:[%s1507 + $0x38] sm:$0xf]
  %v1523 = vld [vmem:[%s1507 + $0x3c] sm:$0xf]
  %v1540 = vunpack.c.l.b16 %v1508
  %v1541 = vunpack.c.l.b16 %v1509
  %v1542 = vunpack.c.l.b16 %v1510
  %v1543 = vunpack.c.l.b16 %v1511
  %v1544 = vunpack.c.l.b16 %v1512
  %v1545 = vunpack.c.l.b16 %v1513
  %v1546 = vunpack.c.l.b16 %v1514
  %v1547 = vunpack.c.l.b16 %v1515
  %v1548 = vunpack.c.l.b16 %v1516
  %v1549 = vunpack.c.l.b16 %v1517
  %v1550 = vunpack.c.l.b16 %v1518
  %v1551 = vunpack.c.l.b16 %v1519
  %v1552 = vunpack.c.l.b16 %v1520
  %v1553 = vunpack.c.l.b16 %v1521
  %v1554 = vunpack.c.l.b16 %v1522
  %v1555 = vunpack.c.l.b16 %v1523
  %v1556 = vpack.c.b16 %v1541, %v1540
  %v1557 = vpack.c.b16 %v1543, %v1542
  %v1558 = vpack.c.b16 %v1545, %v1544
  %v1559 = vpack.c.b16 %v1547, %v1546
  %v1560 = vpack.c.b16 %v1549, %v1548
  %v1561 = vpack.c.b16 %v1551, %v1550
  %v1562 = vpack.c.b16 %v1553, %v1552
  %v1563 = vpack.c.b16 %v1555, %v1554
  %1572 = vmatprep.subr.bf16.mxu0 0
  %1573 = vmatpush1.bf16.msra.mxu0 %v1563
  %1574 = vmatprep.subr.bf16.mxu0 0
  %1575 = vmatpush1.bf16.msra.mxu0 %v1562
  %1576 = vmatprep.subr.bf16.mxu0 0
  %1577 = vmatpush1.bf16.msra.mxu0 %v1561
  %1578 = vmatprep.subr.bf16.mxu0 0
  %1579 = vmatpush1.bf16.msra.mxu0 %v1560
  %1580 = vmatprep.subr.bf16.mxu0 0
  %1581 = vmatpush1.bf16.msra.mxu0 %v1559
  %1582 = vmatprep.subr.bf16.mxu0 0
  %1583 = vmatpush1.bf16.msra.mxu0 %v1558
  %1584 = vmatprep.subr.bf16.mxu0 0
  %1585 = vmatpush1.bf16.msra.mxu0 %v1557
  %1586 = vmatprep.subr.bf16.mxu0 0
  %1587 = vmatpush1.bf16.msra.mxu0 %v1556
  %1588 = vmatprep.subr.bf16.mxu0 0
  %1589 = vmatpush2.bf16.msra.mxu0 0
  %1590 = vmatprep.subr.bf16.mxu0 0
  %1591 = vmatpush2.bf16.msra.mxu0 0
  %1592 = vmatprep.subr.bf16.mxu0 0
  %1593 = vmatpush2.bf16.msra.mxu0 0
  %1594 = vmatprep.subr.bf16.mxu0 0
  %1595 = vmatpush2.bf16.msra.mxu0 0
  %1596 = vmatprep.subr.bf16.mxu0 0
  %1597 = vmatpush2.bf16.msra.mxu0 0
  %1598 = vmatprep.subr.bf16.mxu0 0
  %1599 = vmatpush2.bf16.msra.mxu0 0
  %1600 = vmatprep.subr.bf16.mxu0 0
  %1601 = vmatpush2.bf16.msra.mxu0 0
  %1602 = vmatprep.subr.bf16.mxu0 0
  %1603 = vmatpush2.bf16.msra.mxu0 0
  %1604 = vmatprep.mubr.bf16.mxu0 0
  %1605 = vmatmul.mubr.bf16.gmra.mxu0 %v1505
  %v1606 = vpop.f32.mrf.mxu0
  %v1607 = vadd.f32 0.0, %v1606
  %v1608 = vpop.f32.mrf.mxu0
  %v1609 = vpop.f32.mrf.mxu0
  %v1610 = vadd.f32 0.0, %v1609
  %v1611 = vpop.f32.mrf.mxu0
  %1612 = vmatprep.mubr.bf16.mxu0 0
  %1613 = vmatmul.mubr.bf16.gmra.mxu0 %v1506
  %v1614 = vpop.f32.mrf.mxu0
  %v1615 = vadd.f32 0.0, %v1614
  %v1616 = vpop.f32.mrf.mxu0
  %v1617 = vpop.f32.mrf.mxu0
  %v1618 = vadd.f32 0.0, %v1617
  %v1619 = vpop.f32.mrf.mxu0
  %1620 = vdwg.mxu0
  %v1621 = vadd.f32 %v1497, %v1607
  %v1622 = vadd.f32 %v1498, %v1610
  %v1623 = vadd.f32 %v1499, %v1615
  %v1624 = vadd.f32 %v1500, %v1618
  %v1625 = vld [vmem:[%s0 + $0xd] sm:$0xff]
  %v1626 = vld [vmem:[%s0 + $0x15] sm:$0xff]
  %v1627 = vld [vmem:[%s0 + $0x2d] sm:$0xff]
  %v1628 = vld [vmem:[%s0 + $0x35] sm:$0xff]
  %v1629 = vpack.c.bf16 %v1626, %v1625
  %v1630 = vpack.c.bf16 %v1628, %v1627
  %s1631 = scalar_lea.vmem %s1, 2560
  %v1632 = vld [vmem:[%s1631] sm:$0xf]
  %v1633 = vld [vmem:[%s1631 + $0x4] sm:$0xf]
  %v1634 = vld [vmem:[%s1631 + $0x8] sm:$0xf]
  %v1635 = vld [vmem:[%s1631 + $0xc] sm:$0xf]
  %v1636 = vld [vmem:[%s1631 + $0x10] sm:$0xf]
  %v1637 = vld [vmem:[%s1631 + $0x14] sm:$0xf]
  %v1638 = vld [vmem:[%s1631 + $0x18] sm:$0xf]
  %v1639 = vld [vmem:[%s1631 + $0x1c] sm:$0xf]
  %v1640 = vld [vmem:[%s1631 + $0x20] sm:$0xf]
  %v1641 = vld [vmem:[%s1631 + $0x24] sm:$0xf]
  %v1642 = vld [vmem:[%s1631 + $0x28] sm:$0xf]
  %v1643 = vld [vmem:[%s1631 + $0x2c] sm:$0xf]
  %v1644 = vld [vmem:[%s1631 + $0x30] sm:$0xf]
  %v1645 = vld [vmem:[%s1631 + $0x34] sm:$0xf]
  %v1646 = vld [vmem:[%s1631 + $0x38] sm:$0xf]
  %v1647 = vld [vmem:[%s1631 + $0x3c] sm:$0xf]
  %v1664 = vunpack.c.l.b16 %v1632
  %v1665 = vunpack.c.l.b16 %v1633
  %v1666 = vunpack.c.l.b16 %v1634
  %v1667 = vunpack.c.l.b16 %v1635
  %v1668 = vunpack.c.l.b16 %v1636
  %v1669 = vunpack.c.l.b16 %v1637
  %v1670 = vunpack.c.l.b16 %v1638
  %v1671 = vunpack.c.l.b16 %v1639
  %v1672 = vunpack.c.l.b16 %v1640
  %v1673 = vunpack.c.l.b16 %v1641
  %v1674 = vunpack.c.l.b16 %v1642
  %v1675 = vunpack.c.l.b16 %v1643
  %v1676 = vunpack.c.l.b16 %v1644
  %v1677 = vunpack.c.l.b16 %v1645
  %v1678 = vunpack.c.l.b16 %v1646
  %v1679 = vunpack.c.l.b16 %v1647
  %v1680 = vpack.c.b16 %v1665, %v1664
  %v1681 = vpack.c.b16 %v1667, %v1666
  %v1682 = vpack.c.b16 %v1669, %v1668
  %v1683 = vpack.c.b16 %v1671, %v1670
  %v1684 = vpack.c.b16 %v1673, %v1672
  %v1685 = vpack.c.b16 %v1675, %v1674
  %v1686 = vpack.c.b16 %v1677, %v1676
  %v1687 = vpack.c.b16 %v1679, %v1678
  %1696 = vmatprep.subr.bf16.mxu0 0
  %1697 = vmatpush1.bf16.msra.mxu0 %v1687
  %1698 = vmatprep.subr.bf16.mxu0 0
  %1699 = vmatpush1.bf16.msra.mxu0 %v1686
  %1700 = vmatprep.subr.bf16.mxu0 0
  %1701 = vmatpush1.bf16.msra.mxu0 %v1685
  %1702 = vmatprep.subr.bf16.mxu0 0
  %1703 = vmatpush1.bf16.msra.mxu0 %v1684
  %1704 = vmatprep.subr.bf16.mxu0 0
  %1705 = vmatpush1.bf16.msra.mxu0 %v1683
  %1706 = vmatprep.subr.bf16.mxu0 0
  %1707 = vmatpush1.bf16.msra.mxu0 %v1682
  %1708 = vmatprep.subr.bf16.mxu0 0
  %1709 = vmatpush1.bf16.msra.mxu0 %v1681
  %1710 = vmatprep.subr.bf16.mxu0 0
  %1711 = vmatpush1.bf16.msra.mxu0 %v1680
  %1712 = vmatprep.subr.bf16.mxu0 0
  %1713 = vmatpush2.bf16.msra.mxu0 0
  %1714 = vmatprep.subr.bf16.mxu0 0
  %1715 = vmatpush2.bf16.msra.mxu0 0
  %1716 = vmatprep.subr.bf16.mxu0 0
  %1717 = vmatpush2.bf16.msra.mxu0 0
  %1718 = vmatprep.subr.bf16.mxu0 0
  %1719 = vmatpush2.bf16.msra.mxu0 0
  %1720 = vmatprep.subr.bf16.mxu0 0
  %1721 = vmatpush2.bf16.msra.mxu0 0
  %1722 = vmatprep.subr.bf16.mxu0 0
  %1723 = vmatpush2.bf16.msra.mxu0 0
  %1724 = vmatprep.subr.bf16.mxu0 0
  %1725 = vmatpush2.bf16.msra.mxu0 0
  %1726 = vmatprep.subr.bf16.mxu0 0
  %1727 = vmatpush2.bf16.msra.mxu0 0
  %1728 = vmatprep.mubr.bf16.mxu0 0
  %1729 = vmatmul.mubr.bf16.gmra.mxu0 %v1629
  %v1730 = vpop.f32.mrf.mxu0
  %v1731 = vadd.f32 0.0, %v1730
  %v1732 = vpop.f32.mrf.mxu0
  %v1733 = vpop.f32.mrf.mxu0
  %v1734 = vadd.f32 0.0, %v1733
  %v1735 = vpop.f32.mrf.mxu0
  %1736 = vmatprep.mubr.bf16.mxu0 0
  %1737 = vmatmul.mubr.bf16.gmra.mxu0 %v1630
  %v1738 = vpop.f32.mrf.mxu0
  %v1739 = vadd.f32 0.0, %v1738
  %v1740 = vpop.f32.mrf.mxu0
  %v1741 = vpop.f32.mrf.mxu0
  %v1742 = vadd.f32 0.0, %v1741
  %v1743 = vpop.f32.mrf.mxu0
  %1744 = vdwg.mxu0
  %v1745 = vadd.f32 %v1621, %v1731
  %v1746 = vadd.f32 %v1622, %v1734
  %v1747 = vadd.f32 %v1623, %v1739
  %v1748 = vadd.f32 %v1624, %v1742
  %v1749 = vld [vmem:[%s0 + $0xe] sm:$0xff]
  %v1750 = vld [vmem:[%s0 + $0x16] sm:$0xff]
  %v1751 = vld [vmem:[%s0 + $0x2e] sm:$0xff]
  %v1752 = vld [vmem:[%s0 + $0x36] sm:$0xff]
  %v1753 = vpack.c.bf16 %v1750, %v1749
  %v1754 = vpack.c.bf16 %v1752, %v1751
  %s1755 = scalar_lea.vmem %s1, 2752
  %v1756 = vld [vmem:[%s1755] sm:$0xf]
  %v1757 = vld [vmem:[%s1755 + $0x4] sm:$0xf]
  %v1758 = vld [vmem:[%s1755 + $0x8] sm:$0xf]
  %v1759 = vld [vmem:[%s1755 + $0xc] sm:$0xf]
  %v1760 = vld [vmem:[%s1755 + $0x10] sm:$0xf]
  %v1761 = vld [vmem:[%s1755 + $0x14] sm:$0xf]
  %v1762 = vld [vmem:[%s1755 + $0x18] sm:$0xf]
  %v1763 = vld [vmem:[%s1755 + $0x1c] sm:$0xf]
  %v1764 = vld [vmem:[%s1755 + $0x20] sm:$0xf]
  %v1765 = vld [vmem:[%s1755 + $0x24] sm:$0xf]
  %v1766 = vld [vmem:[%s1755 + $0x28] sm:$0xf]
  %v1767 = vld [vmem:[%s1755 + $0x2c] sm:$0xf]
  %v1768 = vld [vmem:[%s1755 + $0x30] sm:$0xf]
  %v1769 = vld [vmem:[%s1755 + $0x34] sm:$0xf]
  %v1770 = vld [vmem:[%s1755 + $0x38] sm:$0xf]
  %v1771 = vld [vmem:[%s1755 + $0x3c] sm:$0xf]
  %v1788 = vunpack.c.l.b16 %v1756
  %v1789 = vunpack.c.l.b16 %v1757
  %v1790 = vunpack.c.l.b16 %v1758
  %v1791 = vunpack.c.l.b16 %v1759
  %v1792 = vunpack.c.l.b16 %v1760
  %v1793 = vunpack.c.l.b16 %v1761
  %v1794 = vunpack.c.l.b16 %v1762
  %v1795 = vunpack.c.l.b16 %v1763
  %v1796 = vunpack.c.l.b16 %v1764
  %v1797 = vunpack.c.l.b16 %v1765
  %v1798 = vunpack.c.l.b16 %v1766
  %v1799 = vunpack.c.l.b16 %v1767
  %v1800 = vunpack.c.l.b16 %v1768
  %v1801 = vunpack.c.l.b16 %v1769
  %v1802 = vunpack.c.l.b16 %v1770
  %v1803 = vunpack.c.l.b16 %v1771
  %v1804 = vpack.c.b16 %v1789, %v1788
  %v1805 = vpack.c.b16 %v1791, %v1790
  %v1806 = vpack.c.b16 %v1793, %v1792
  %v1807 = vpack.c.b16 %v1795, %v1794
  %v1808 = vpack.c.b16 %v1797, %v1796
  %v1809 = vpack.c.b16 %v1799, %v1798
  %v1810 = vpack.c.b16 %v1801, %v1800
  %v1811 = vpack.c.b16 %v1803, %v1802
  %1820 = vmatprep.subr.bf16.mxu0 0
  %1821 = vmatpush1.bf16.msra.mxu0 %v1811
  %1822 = vmatprep.subr.bf16.mxu0 0
  %1823 = vmatpush1.bf16.msra.mxu0 %v1810
  %1824 = vmatprep.subr.bf16.mxu0 0
  %1825 = vmatpush1.bf16.msra.mxu0 %v1809
  %1826 = vmatprep.subr.bf16.mxu0 0
  %1827 = vmatpush1.bf16.msra.mxu0 %v1808
  %1828 = vmatprep.subr.bf16.mxu0 0
  %1829 = vmatpush1.bf16.msra.mxu0 %v1807
  %1830 = vmatprep.subr.bf16.mxu0 0
  %1831 = vmatpush1.bf16.msra.mxu0 %v1806
  %1832 = vmatprep.subr.bf16.mxu0 0
  %1833 = vmatpush1.bf16.msra.mxu0 %v1805
  %1834 = vmatprep.subr.bf16.mxu0 0
  %1835 = vmatpush1.bf16.msra.mxu0 %v1804
  %1836 = vmatprep.subr.bf16.mxu0 0
  %1837 = vmatpush2.bf16.msra.mxu0 0
  %1838 = vmatprep.subr.bf16.mxu0 0
  %1839 = vmatpush2.bf16.msra.mxu0 0
  %1840 = vmatprep.subr.bf16.mxu0 0
  %1841 = vmatpush2.bf16.msra.mxu0 0
  %1842 = vmatprep.subr.bf16.mxu0 0
  %1843 = vmatpush2.bf16.msra.mxu0 0
  %1844 = vmatprep.subr.bf16.mxu0 0
  %1845 = vmatpush2.bf16.msra.mxu0 0
  %1846 = vmatprep.subr.bf16.mxu0 0
  %1847 = vmatpush2.bf16.msra.mxu0 0
  %1848 = vmatprep.subr.bf16.mxu0 0
  %1849 = vmatpush2.bf16.msra.mxu0 0
  %1850 = vmatprep.subr.bf16.mxu0 0
  %1851 = vmatpush2.bf16.msra.mxu0 0
  %1852 = vmatprep.mubr.bf16.mxu0 0
  %1853 = vmatmul.mubr.bf16.gmra.mxu0 %v1753
  %v1854 = vpop.f32.mrf.mxu0
  %v1855 = vadd.f32 0.0, %v1854
  %v1856 = vpop.f32.mrf.mxu0
  %v1857 = vpop.f32.mrf.mxu0
  %v1858 = vadd.f32 0.0, %v1857
  %v1859 = vpop.f32.mrf.mxu0
  %1860 = vmatprep.mubr.bf16.mxu0 0
  %1861 = vmatmul.mubr.bf16.gmra.mxu0 %v1754
  %v1862 = vpop.f32.mrf.mxu0
  %v1863 = vadd.f32 0.0, %v1862
  %v1864 = vpop.f32.mrf.mxu0
  %v1865 = vpop.f32.mrf.mxu0
  %v1866 = vadd.f32 0.0, %v1865
  %v1867 = vpop.f32.mrf.mxu0
  %1868 = vdwg.mxu0
  %v1869 = vadd.f32 %v1745, %v1855
  %v1870 = vadd.f32 %v1746, %v1858
  %v1871 = vadd.f32 %v1747, %v1863
  %v1872 = vadd.f32 %v1748, %v1866
  %1873 = vst [vmem:[%s2] sm:$0xff] %v1869
  %1874 = vst [vmem:[%s2 + $0x8] sm:$0xff] %v1870
  %1875 = vst [vmem:[%s2 + $0x10] sm:$0xff] %v1871
  %1876 = vst [vmem:[%s2 + $0x18] sm:$0xff] %v1872
  %vm1877 = vcmp.lt.s32.totalorder %v20, 16
  %vm1878 = vmand %vm17, %vm1877
  %vm1879 = vmand %vm18, %vm1877
  %vm1880 = vcmp.lt.f32.partialorder %v1869, 0.6
  %vm1881 = vcmp.lt.f32.partialorder %v1870, 0.6
  %vm1882 = vcmp.lt.f32.partialorder %v1871, 0.6
  %vm1883 = vcmp.lt.f32.partialorder %v1872, 0.6
  %v1884 = vsel %vm1878, 1, 0
  %v1885 = vsel %vm1879, 1, 0
  %vm1886 = vcmp.eq.s32.totalorder %v1884, 1
  %vm1887 = vcmp.eq.s32.totalorder %v1885, 1
  %vm1888 = vmand %vm1886, %vm1880
  %vm1889 = vmand %vm1887, %vm1881
  %vm1890 = vmand %vm1886, %vm1882
  %vm1891 = vmand %vm1887, %vm1883
  %v1892 = vsel %vm1888, %v1869, -inf
  %v1893 = vsel %vm1889, %v1870, -inf
  %v1894 = vsel %vm1890, %v1871, -inf
  %v1895 = vsel %vm1891, %v1872, -inf
  %v1896 = vmax.f32 %v1892, %v1894
  %v1897 = vmax.f32 %v1893, %v1895
  %1898 = vst [vmem:[%s3] sm:$0xff] %v1896
  %1899 = vst [vmem:[%s3 + $0x8] sm:$0xff] %v1897
  // Predicated region
  $region10: #{soft_erosion.2} parent=0 // pred_check
    _
  $region11: #{soft_erosion.2} parent=0 // pred_check_branch
    %1901 = sbr.rel (0) target = $region13
  $region12: #{soft_erosion.2} parent=0 // pred_region
    _
  $region13: #{soft_erosion.2} parent=0 // pred_fallthru
    _
  // Predicated region
  $region14: #{soft_erosion.2} parent=0 // pred_check
    _
  $region15: #{soft_erosion.2} parent=0 // pred_check_branch
    %1903 = sbr.rel (0) target = $region17
  $region16: #{soft_erosion.2} parent=0 // pred_region
    _
  $region17: #{soft_erosion.2} parent=0 // pred_fallthru
    _
  // Predicated region
  $region18: #{soft_erosion.2} parent=0 // pred_check
    _
  $region19: #{soft_erosion.2} parent=0 // pred_check_branch
    %1905 = sbr.rel (0) target = $region21
  $region20: #{soft_erosion.2} parent=0 // pred_region
    _
  $region21: #{soft_erosion.2} parent=0 // pred_fallthru
    _
  // Predicated region
  $region22: #{soft_erosion.2} parent=0 // pred_check
    _
  $region23: #{soft_erosion.2} parent=0 // pred_check_branch
    %1907 = sbr.rel (0) target = $region25
  $region24: #{soft_erosion.2} parent=0 // pred_region
    _
  $region25: #{soft_erosion.2} parent=0 // pred_fallthru
    _

</llo_original>
